<compile_context>
chip_gen: v6e
topology: v6e:2x2x1
jax: 0.10.0
libtpu: 0.0.40
codegen_flags: <defaults>
</compile_context>

<pallas_src>
import jax
import jax.numpy as jnp
from jax import lax
from jax.experimental import pallas as pl
from jax.experimental.pallas import tpu as pltpu


# ----------------------------- fused kernel -----------------------------------


def _make_fused_refinement_kernel(num_layers: int, T: int):
    L = int(num_layers)
    T = int(T)

    def kernel(x_ref, w_in_ref, b_in_ref, wd_ref, bd_ref, w1_ref, b1_ref,
               w_out_ref, b_out_ref, o_ref, act_ref):
        # x_ref:     (1, Cin, T)   input in PyTorch NCT layout
        # w_in_ref:  (F, Cin)      b_in_ref: (F, 1)
        # wd_ref:    (L, F, 3F)    bd_ref:  (L, F, 1)   (taps [t-d, t, t+d] stacked on K)
        # w1_ref:    (L, F, F)     b1_ref:  (L, F, 1)
        # w_out_ref: (nc, F)       b_out_ref: (nc, 1)
        # o_ref:     (1, nc, T)    output in NCT layout
        # act_ref:   (F, T) f32 VMEM scratch -- activation resident across layers
        x_ct = x_ref[0]                                              # (Cin, T)

        # Input 1x1 conv: (F, Cin) @ (Cin, T) -> (F, T)
        act_ref[...] = (
            jnp.dot(w_in_ref[...], x_ct, preferred_element_type=jnp.float32)
            + b_in_ref[...]
        )

        t_idx = lax.broadcasted_iota(jnp.int32, (1, T), 1)           # lane index

        F = act_ref.shape[0]
        for i in range(L):                                           # static unroll
            d = 2 ** i
            x = act_ref[...]                                         # (F, T)
            sl = d % T
            sr = (-d) % T
            rl = pltpu.roll(x, sl, axis=1) if sl else x              # x[:, t-d] wrapped
            rr = pltpu.roll(x, sr, axis=1) if sr else x              # x[:, t+d] wrapped
            x_left = jnp.where(t_idx >= d, rl, 0.0)                  # zero-pad left
            x_right = jnp.where(t_idx < T - d, rr, 0.0)              # zero-pad right

            # Dilated conv (k=3, pad=d) as one stacked-K matmul: (F, 3F) @ (3F, T)
            xcat = jnp.concatenate([x_left, x, x_right], axis=0)     # (3F, T)
            h = (jnp.dot(wd_ref[i], xcat, preferred_element_type=jnp.float32)
                 + bd_ref[i])
            h = jnp.maximum(h, 0.0)                                  # ReLU
            # 1x1 conv
            h = (jnp.dot(w1_ref[i], h, preferred_element_type=jnp.float32)
                 + b1_ref[i])
            # residual add (dropout == identity in eval)
            act_ref[...] = x + h

        # Output 1x1 conv, written directly in NCT: (nc, F) @ (F, T) -> (nc, T)
        out = (jnp.dot(w_out_ref[...], act_ref[...],
                       preferred_element_type=jnp.float32)
               + b_out_ref[...])
        o_ref[0] = out.astype(o_ref.dtype)

    return kernel


# ----------------------------- wrapper -----------------------------------------


def refinement_forward(params, x_nct):
    """x_nct: (N, dim, T) PyTorch NCT layout; returns (N, num_classes, T)."""
    N, Cin, T = x_nct.shape
    L, Fm, _ = params["w1"].shape
    nc = params["w_out"].shape[0]

    kernel = _make_fused_refinement_kernel(L, T)

    flops = 2 * N * T * (Fm * Cin + L * (Fm * 3 * Fm + Fm * Fm) + nc * Fm)
    weight_bytes = 4 * sum(int(params[k].size) for k in
                           ("w_in", "b_in", "wd", "bd", "w1", "b1", "w_out", "b_out"))
    bytes_accessed = 4 * (N * Cin * T + N * nc * T) + weight_bytes

    return pl.pallas_call(
        kernel,
        out_shape=jax.ShapeDtypeStruct((N, nc, T), x_nct.dtype),
        grid=(N,),
        in_specs=[
            pl.BlockSpec((1, Cin, T), lambda n: (n, 0, 0)),
            pl.BlockSpec((Fm, Cin), lambda n: (0, 0)),
            pl.BlockSpec((Fm, 1), lambda n: (0, 0)),
            pl.BlockSpec((L, Fm, 3 * Fm), lambda n: (0, 0, 0)),
            pl.BlockSpec((L, Fm, 1), lambda n: (0, 0, 0)),
            pl.BlockSpec((L, Fm, Fm), lambda n: (0, 0, 0)),
            pl.BlockSpec((L, Fm, 1), lambda n: (0, 0, 0)),
            pl.BlockSpec((nc, Fm), lambda n: (0, 0)),
            pl.BlockSpec((nc, 1), lambda n: (0, 0)),
        ],
        out_specs=pl.BlockSpec((1, nc, T), lambda n: (n, 0, 0)),
        scratch_shapes=[pltpu.VMEM((Fm, T), jnp.float32)],
        compiler_params=pltpu.CompilerParams(dimension_semantics=("parallel",)),
        cost_estimate=pl.CostEstimate(flops=flops, transcendentals=0,
                                      bytes_accessed=bytes_accessed),
    )(x_nct, params["w_in"], params["b_in"], params["wd"], params["bd"],
      params["w1"], params["b1"], params["w_out"], params["b_out"])


# ----------------------------- params ------------------------------------------


def init_refinement_params(key, num_layers, num_f_maps, dim, num_classes):
    """Deterministic synthetic parameters, channel-major (Cout, Cin) layouts:
      w_in : (F, dim)            b_in : (F, 1)
      wd   : (L, F, 3F)  taps [x[t-d], x[t], x[t+d]] stacked along the K axis
      bd   : (L, F, 1)
      w1   : (L, F, F)           b1   : (L, F, 1)
      w_out: (num_classes, F)    b_out: (num_classes, 1)
    """
    F = num_f_maps
    keys = jax.random.split(key, 8)
    s = 0.1
    return {
        "w_in": s * jax.random.normal(keys[0], (F, dim), jnp.float32),
        "b_in": s * jax.random.normal(keys[1], (F, 1), jnp.float32),
        "wd": s * jax.random.normal(keys[2], (num_layers, F, 3 * F), jnp.float32),
        "bd": s * jax.random.normal(keys[3], (num_layers, F, 1), jnp.float32),
        "w1": s * jax.random.normal(keys[4], (num_layers, F, F), jnp.float32),
        "b1": s * jax.random.normal(keys[5], (num_layers, F, 1), jnp.float32),
        "w_out": s * jax.random.normal(keys[6], (num_classes, F), jnp.float32),
        "b_out": s * jax.random.normal(keys[7], (num_classes, 1), jnp.float32),
    }


# ----------------------------- reference (pure JAX) -----------------------------


def refinement_reference(params, x_nct):
    x = x_nct.astype(jnp.float32)                                    # (N, Cin, T)
    out = jnp.einsum("fc,nct->nft", params["w_in"], x) + params["b_in"][None]
    N, F, T = out.shape
    L = params["wd"].shape[0]
    for i in range(L):
        d = 2 ** i
        if d < T:
            zpad = jnp.zeros((N, F, d), out.dtype)
            x_left = jnp.concatenate([zpad, out[:, :, : T - d]], axis=2)
            x_right = jnp.concatenate([out[:, :, d:], zpad], axis=2)
        else:
            x_left = jnp.zeros_like(out)
            x_right = jnp.zeros_like(out)
        W = params["wd"][i]                                          # (F, 3F)
        h = (jnp.einsum("fg,ngt->nft", W[:, :F], x_left)
             + jnp.einsum("fg,ngt->nft", W[:, F:2 * F], out)
             + jnp.einsum("fg,ngt->nft", W[:, 2 * F:], x_right)
             + params["bd"][i][None])
        h = jnp.maximum(h, 0.0)
        h = jnp.einsum("fg,ngt->nft", params["w1"][i], h) + params["b1"][i][None]
        out = out + h
    out = jnp.einsum("cf,nft->nct", params["w_out"], out) + params["b_out"][None]
    return out


# ----------------------------- main ---------------------------------------------

if __name__ == "__main__":
    num_layers = 3
    num_f_maps = 32
    dim = 16          # input channels (e.g. class logits from the previous stage)
    num_classes = 8
    N, T = 2, 16

    key = jax.random.PRNGKey(0)
    k_param, k_x = jax.random.split(key)
    params = init_refinement_params(k_param, num_layers, num_f_maps, dim, num_classes)
    x = jax.random.normal(k_x, (N, dim, T), jnp.float32)  # PyTorch NCT layout

    y = refinement_forward(params, x)
    y = jax.block_until_ready(y)

    y_ref = refinement_reference(params, x)
    assert y.shape == (N, num_classes, T)
    assert jnp.allclose(y, y_ref, atol=1e-3, rtol=1e-3), "mismatch vs pure-JAX reference"

    print("KERNEL_OK")
</pallas_src>

<mosaic_0001>
module attributes {stable_mosaic.version = 11 : i64} {
  func.func @kernel(%arg0: i32, %arg1: memref<1x16x16xf32, #tpu.memory_space<vmem>>, %arg2: memref<32x16xf32, #tpu.memory_space<vmem>>, %arg3: memref<32x1xf32, #tpu.memory_space<vmem>>, %arg4: memref<3x32x96xf32, #tpu.memory_space<vmem>>, %arg5: memref<3x32x1xf32, #tpu.memory_space<vmem>>, %arg6: memref<3x32x32xf32, #tpu.memory_space<vmem>>, %arg7: memref<3x32x1xf32, #tpu.memory_space<vmem>>, %arg8: memref<8x32xf32, #tpu.memory_space<vmem>>, %arg9: memref<8x1xf32, #tpu.memory_space<vmem>>, %arg10: memref<1x8x16xf32, #tpu.memory_space<vmem>>, %arg11: memref<32x16xf32, #tpu.memory_space<vmem>>) attributes {dimension_semantics = [#tpu.dimension_semantics<parallel>], iteration_bounds = array<i64: 2>, scalar_prefetch = 0 : i64, scratch_operands = 1 : i64, tpu.core_type = #tpu.core_type<tc>, window_params = [{transform_indices = @transform_0, window_bounds = array<i64: 1, 16, 16>}, {pipeline_mode = #tpu.pipeline_mode<synchronous>, transform_indices = @transform_1, window_bounds = array<i64: 32, 16>}, {pipeline_mode = #tpu.pipeline_mode<synchronous>, transform_indices = @transform_2, window_bounds = array<i64: 32, 1>}, {pipeline_mode = #tpu.pipeline_mode<synchronous>, transform_indices = @transform_3, window_bounds = array<i64: 3, 32, 96>}, {pipeline_mode = #tpu.pipeline_mode<synchronous>, transform_indices = @transform_4, window_bounds = array<i64: 3, 32, 1>}, {pipeline_mode = #tpu.pipeline_mode<synchronous>, transform_indices = @transform_5, window_bounds = array<i64: 3, 32, 32>}, {pipeline_mode = #tpu.pipeline_mode<synchronous>, transform_indices = @transform_6, window_bounds = array<i64: 3, 32, 1>}, {pipeline_mode = #tpu.pipeline_mode<synchronous>, transform_indices = @transform_7, window_bounds = array<i64: 8, 32>}, {pipeline_mode = #tpu.pipeline_mode<synchronous>, transform_indices = @transform_8, window_bounds = array<i64: 8, 1>}, {transform_indices = @transform_9, window_bounds = array<i64: 1, 8, 16>}]} {
    %c0 = arith.constant 0 : index
    %c0_0 = arith.constant 0 : index
    %c0_1 = arith.constant 0 : index
    %0 = vector.load %arg1[%c0, %c0_0, %c0_1] : memref<1x16x16xf32, #tpu.memory_space<vmem>>, vector<1x16x16xf32>
    %1 = vector.shape_cast %0 : vector<1x16x16xf32> to vector<16x16xf32>
    %c0_2 = arith.constant 0 : index
    %c0_3 = arith.constant 0 : index
    %2 = vector.load %arg2[%c0_2, %c0_3] : memref<32x16xf32, #tpu.memory_space<vmem>>, vector<32x16xf32>
    %cst = arith.constant dense<0.000000e+00> : vector<32x16xf32>
    %3 = tpu.matmul %2, %1, %cst {dimension_numbers = #tpu.dot_dimension_numbers<[1], [0], [0], [1], [0, 0, 1, 1], [], []>} : vector<32x16xf32>, vector<16x16xf32>, vector<32x16xf32> -> vector<32x16xf32>
    %c0_4 = arith.constant 0 : index
    %c0_5 = arith.constant 0 : index
    %4 = vector.load %arg3[%c0_4, %c0_5] : memref<32x1xf32, #tpu.memory_space<vmem>>, vector<32x1xf32>
    %5 = vector.broadcast %4 : vector<32x1xf32> to vector<32x16xf32>
    %6 = arith.addf %3, %5 : vector<32x16xf32>
    %c0_6 = arith.constant 0 : index
    %c0_7 = arith.constant 0 : index
    %7 = vector.load %arg11[%c0_6, %c0_7] : memref<32x16xf32, #tpu.memory_space<vmem>>, vector<32x16xf32>
    tpu.vector_store %arg11[%c0_6, %c0_7], %6 {strides = array<i32>} : memref<32x16xf32, #tpu.memory_space<vmem>>, vector<32x16xf32>,
    %8 = tpu.iota {dimensions = array<i32: 1>} : vector<1x16xi32>
    %c0_8 = arith.constant 0 : index
    %c0_9 = arith.constant 0 : index
    %9 = vector.load %arg11[%c0_8, %c0_9] : memref<32x16xf32, #tpu.memory_space<vmem>>, vector<32x16xf32>
    %c1_i32 = arith.constant 1 : i32
    %10 = tpu.dynamic_rotate %9 by %c1_i32 dim 1 : vector<32x16xf32>, i32 -> vector<32x16xf32>
    %c15_i32 = arith.constant 15 : i32
    %11 = tpu.dynamic_rotate %9 by %c15_i32 dim 1 : vector<32x16xf32>, i32 -> vector<32x16xf32>
    %c1_i32_10 = arith.constant 1 : i32
    %12 = vector.broadcast %c1_i32_10 : i32 to vector<1x16xi32>
    %13 = arith.cmpi sge, %8, %12 : vector<1x16xi32>
    %cst_11 = arith.constant 0.000000e+00 : f32
    %14 = vector.shape_cast %13 : vector<1x16xi1> to vector<1x16xi1>
    %15 = vector.broadcast %14 : vector<1x16xi1> to vector<32x16xi1>
    %16 = vector.broadcast %cst_11 : f32 to vector<32x16xf32>
    %17 = arith.select %15, %10, %16 : vector<32x16xi1>, vector<32x16xf32>
    %c15_i32_12 = arith.constant 15 : i32
    %18 = vector.broadcast %c15_i32_12 : i32 to vector<1x16xi32>
    %19 = arith.cmpi slt, %8, %18 : vector<1x16xi32>
    %cst_13 = arith.constant 0.000000e+00 : f32
    %20 = vector.shape_cast %19 : vector<1x16xi1> to vector<1x16xi1>
    %21 = vector.broadcast %20 : vector<1x16xi1> to vector<32x16xi1>
    %22 = vector.broadcast %cst_13 : f32 to vector<32x16xf32>
    %23 = arith.select %21, %11, %22 : vector<32x16xi1>, vector<32x16xf32>
    %24 = tpu.concatenate %17, %9, %23 in 0 : vector<32x16xf32>, vector<32x16xf32>, vector<32x16xf32> -> vector<96x16xf32>
    %c0_14 = arith.constant 0 : index
    %c0_15 = arith.constant 0 : index
    %c0_16 = arith.constant 0 : index
    %25 = vector.load %arg4[%c0_14, %c0_15, %c0_16] : memref<3x32x96xf32, #tpu.memory_space<vmem>>, vector<1x32x96xf32>
    %26 = vector.shape_cast %25 : vector<1x32x96xf32> to vector<32x96xf32>
    %cst_17 = arith.constant dense<0.000000e+00> : vector<32x16xf32>
    %27 = tpu.matmul %26, %24, %cst_17 {dimension_numbers = #tpu.dot_dimension_numbers<[1], [0], [0], [1], [0, 0, 1, 1], [], []>} : vector<32x96xf32>, vector<96x16xf32>, vector<32x16xf32> -> vector<32x16xf32>
    %c0_18 = arith.constant 0 : index
    %c0_19 = arith.constant 0 : index
    %c0_20 = arith.constant 0 : index
    %28 = vector.load %arg5[%c0_18, %c0_19, %c0_20] : memref<3x32x1xf32, #tpu.memory_space<vmem>>, vector<1x32x1xf32>
    %29 = vector.shape_cast %28 : vector<1x32x1xf32> to vector<32x1xf32>
    %30 = vector.broadcast %29 : vector<32x1xf32> to vector<32x16xf32>
    %31 = arith.addf %27, %30 : vector<32x16xf32>
    %cst_21 = arith.constant 0.000000e+00 : f32
    %32 = vector.broadcast %cst_21 : f32 to vector<32x16xf32>
    %33 = arith.maximumf %31, %32 : vector<32x16xf32>
    %c0_22 = arith.constant 0 : index
    %c0_23 = arith.constant 0 : index
    %c0_24 = arith.constant 0 : index
    %34 = vector.load %arg6[%c0_22, %c0_23, %c0_24] : memref<3x32x32xf32, #tpu.memory_space<vmem>>, vector<1x32x32xf32>
    %35 = vector.shape_cast %34 : vector<1x32x32xf32> to vector<32x32xf32>
    %cst_25 = arith.constant dense<0.000000e+00> : vector<32x16xf32>
    %36 = tpu.matmul %35, %33, %cst_25 {dimension_numbers = #tpu.dot_dimension_numbers<[1], [0], [0], [1], [0, 0, 1, 1], [], []>} : vector<32x32xf32>, vector<32x16xf32>, vector<32x16xf32> -> vector<32x16xf32>
    %c0_26 = arith.constant 0 : index
    %c0_27 = arith.constant 0 : index
    %c0_28 = arith.constant 0 : index
    %37 = vector.load %arg7[%c0_26, %c0_27, %c0_28] : memref<3x32x1xf32, #tpu.memory_space<vmem>>, vector<1x32x1xf32>
    %38 = vector.shape_cast %37 : vector<1x32x1xf32> to vector<32x1xf32>
    %39 = vector.broadcast %38 : vector<32x1xf32> to vector<32x16xf32>
    %40 = arith.addf %36, %39 : vector<32x16xf32>
    %41 = arith.addf %9, %40 : vector<32x16xf32>
    %c0_29 = arith.constant 0 : index
    %c0_30 = arith.constant 0 : index
    %42 = vector.load %arg11[%c0_29, %c0_30] : memref<32x16xf32, #tpu.memory_space<vmem>>, vector<32x16xf32>
    tpu.vector_store %arg11[%c0_29, %c0_30], %41 {strides = array<i32>} : memref<32x16xf32, #tpu.memory_space<vmem>>, vector<32x16xf32>,
    %c0_31 = arith.constant 0 : index
    %c0_32 = arith.constant 0 : index
    %43 = vector.load %arg11[%c0_31, %c0_32] : memref<32x16xf32, #tpu.memory_space<vmem>>, vector<32x16xf32>
    %c2_i32 = arith.constant 2 : i32
    %44 = tpu.dynamic_rotate %43 by %c2_i32 dim 1 : vector<32x16xf32>, i32 -> vector<32x16xf32>
    %c14_i32 = arith.constant 14 : i32
    %45 = tpu.dynamic_rotate %43 by %c14_i32 dim 1 : vector<32x16xf32>, i32 -> vector<32x16xf32>
    %c2_i32_33 = arith.constant 2 : i32
    %46 = vector.broadcast %c2_i32_33 : i32 to vector<1x16xi32>
    %47 = arith.cmpi sge, %8, %46 : vector<1x16xi32>
    %cst_34 = arith.constant 0.000000e+00 : f32
    %48 = vector.shape_cast %47 : vector<1x16xi1> to vector<1x16xi1>
    %49 = vector.broadcast %48 : vector<1x16xi1> to vector<32x16xi1>
    %50 = vector.broadcast %cst_34 : f32 to vector<32x16xf32>
    %51 = arith.select %49, %44, %50 : vector<32x16xi1>, vector<32x16xf32>
    %c14_i32_35 = arith.constant 14 : i32
    %52 = vector.broadcast %c14_i32_35 : i32 to vector<1x16xi32>
    %53 = arith.cmpi slt, %8, %52 : vector<1x16xi32>
    %cst_36 = arith.constant 0.000000e+00 : f32
    %54 = vector.shape_cast %53 : vector<1x16xi1> to vector<1x16xi1>
    %55 = vector.broadcast %54 : vector<1x16xi1> to vector<32x16xi1>
    %56 = vector.broadcast %cst_36 : f32 to vector<32x16xf32>
    %57 = arith.select %55, %45, %56 : vector<32x16xi1>, vector<32x16xf32>
    %58 = tpu.concatenate %51, %43, %57 in 0 : vector<32x16xf32>, vector<32x16xf32>, vector<32x16xf32> -> vector<96x16xf32>
    %c1 = arith.constant 1 : index
    %c0_37 = arith.constant 0 : index
    %c0_38 = arith.constant 0 : index
    %59 = vector.load %arg4[%c1, %c0_37, %c0_38] : memref<3x32x96xf32, #tpu.memory_space<vmem>>, vector<1x32x96xf32>
    %60 = vector.shape_cast %59 : vector<1x32x96xf32> to vector<32x96xf32>
    %cst_39 = arith.constant dense<0.000000e+00> : vector<32x16xf32>
    %61 = tpu.matmul %60, %58, %cst_39 {dimension_numbers = #tpu.dot_dimension_numbers<[1], [0], [0], [1], [0, 0, 1, 1], [], []>} : vector<32x96xf32>, vector<96x16xf32>, vector<32x16xf32> -> vector<32x16xf32>
    %c1_40 = arith.constant 1 : index
    %c0_41 = arith.constant 0 : index
    %c0_42 = arith.constant 0 : index
    %62 = vector.load %arg5[%c1_40, %c0_41, %c0_42] : memref<3x32x1xf32, #tpu.memory_space<vmem>>, vector<1x32x1xf32>
    %63 = vector.shape_cast %62 : vector<1x32x1xf32> to vector<32x1xf32>
    %64 = vector.broadcast %63 : vector<32x1xf32> to vector<32x16xf32>
    %65 = arith.addf %61, %64 : vector<32x16xf32>
    %cst_43 = arith.constant 0.000000e+00 : f32
    %66 = vector.broadcast %cst_43 : f32 to vector<32x16xf32>
    %67 = arith.maximumf %65, %66 : vector<32x16xf32>
    %c1_44 = arith.constant 1 : index
    %c0_45 = arith.constant 0 : index
    %c0_46 = arith.constant 0 : index
    %68 = vector.load %arg6[%c1_44, %c0_45, %c0_46] : memref<3x32x32xf32, #tpu.memory_space<vmem>>, vector<1x32x32xf32>
    %69 = vector.shape_cast %68 : vector<1x32x32xf32> to vector<32x32xf32>
    %cst_47 = arith.constant dense<0.000000e+00> : vector<32x16xf32>
    %70 = tpu.matmul %69, %67, %cst_47 {dimension_numbers = #tpu.dot_dimension_numbers<[1], [0], [0], [1], [0, 0, 1, 1], [], []>} : vector<32x32xf32>, vector<32x16xf32>, vector<32x16xf32> -> vector<32x16xf32>
    %c1_48 = arith.constant 1 : index
    %c0_49 = arith.constant 0 : index
    %c0_50 = arith.constant 0 : index
    %71 = vector.load %arg7[%c1_48, %c0_49, %c0_50] : memref<3x32x1xf32, #tpu.memory_space<vmem>>, vector<1x32x1xf32>
    %72 = vector.shape_cast %71 : vector<1x32x1xf32> to vector<32x1xf32>
    %73 = vector.broadcast %72 : vector<32x1xf32> to vector<32x16xf32>
    %74 = arith.addf %70, %73 : vector<32x16xf32>
    %75 = arith.addf %43, %74 : vector<32x16xf32>
    %c0_51 = arith.constant 0 : index
    %c0_52 = arith.constant 0 : index
    %76 = vector.load %arg11[%c0_51, %c0_52] : memref<32x16xf32, #tpu.memory_space<vmem>>, vector<32x16xf32>
    tpu.vector_store %arg11[%c0_51, %c0_52], %75 {strides = array<i32>} : memref<32x16xf32, #tpu.memory_space<vmem>>, vector<32x16xf32>,
    %c0_53 = arith.constant 0 : index
    %c0_54 = arith.constant 0 : index
    %77 = vector.load %arg11[%c0_53, %c0_54] : memref<32x16xf32, #tpu.memory_space<vmem>>, vector<32x16xf32>
    %c4_i32 = arith.constant 4 : i32
    %78 = tpu.dynamic_rotate %77 by %c4_i32 dim 1 : vector<32x16xf32>, i32 -> vector<32x16xf32>
    %c12_i32 = arith.constant 12 : i32
    %79 = tpu.dynamic_rotate %77 by %c12_i32 dim 1 : vector<32x16xf32>, i32 -> vector<32x16xf32>
    %c4_i32_55 = arith.constant 4 : i32
    %80 = vector.broadcast %c4_i32_55 : i32 to vector<1x16xi32>
    %81 = arith.cmpi sge, %8, %80 : vector<1x16xi32>
    %cst_56 = arith.constant 0.000000e+00 : f32
    %82 = vector.shape_cast %81 : vector<1x16xi1> to vector<1x16xi1>
    %83 = vector.broadcast %82 : vector<1x16xi1> to vector<32x16xi1>
    %84 = vector.broadcast %cst_56 : f32 to vector<32x16xf32>
    %85 = arith.select %83, %78, %84 : vector<32x16xi1>, vector<32x16xf32>
    %c12_i32_57 = arith.constant 12 : i32
    %86 = vector.broadcast %c12_i32_57 : i32 to vector<1x16xi32>
    %87 = arith.cmpi slt, %8, %86 : vector<1x16xi32>
    %cst_58 = arith.constant 0.000000e+00 : f32
    %88 = vector.shape_cast %87 : vector<1x16xi1> to vector<1x16xi1>
    %89 = vector.broadcast %88 : vector<1x16xi1> to vector<32x16xi1>
    %90 = vector.broadcast %cst_58 : f32 to vector<32x16xf32>
    %91 = arith.select %89, %79, %90 : vector<32x16xi1>, vector<32x16xf32>
    %92 = tpu.concatenate %85, %77, %91 in 0 : vector<32x16xf32>, vector<32x16xf32>, vector<32x16xf32> -> vector<96x16xf32>
    %c2 = arith.constant 2 : index
    %c0_59 = arith.constant 0 : index
    %c0_60 = arith.constant 0 : index
    %93 = vector.load %arg4[%c2, %c0_59, %c0_60] : memref<3x32x96xf32, #tpu.memory_space<vmem>>, vector<1x32x96xf32>
    %94 = vector.shape_cast %93 : vector<1x32x96xf32> to vector<32x96xf32>
    %cst_61 = arith.constant dense<0.000000e+00> : vector<32x16xf32>
    %95 = tpu.matmul %94, %92, %cst_61 {dimension_numbers = #tpu.dot_dimension_numbers<[1], [0], [0], [1], [0, 0, 1, 1], [], []>} : vector<32x96xf32>, vector<96x16xf32>, vector<32x16xf32> -> vector<32x16xf32>
    %c2_62 = arith.constant 2 : index
    %c0_63 = arith.constant 0 : index
    %c0_64 = arith.constant 0 : index
    %96 = vector.load %arg5[%c2_62, %c0_63, %c0_64] : memref<3x32x1xf32, #tpu.memory_space<vmem>>, vector<1x32x1xf32>
    %97 = vector.shape_cast %96 : vector<1x32x1xf32> to vector<32x1xf32>
    %98 = vector.broadcast %97 : vector<32x1xf32> to vector<32x16xf32>
    %99 = arith.addf %95, %98 : vector<32x16xf32>
    %cst_65 = arith.constant 0.000000e+00 : f32
    %100 = vector.broadcast %cst_65 : f32 to vector<32x16xf32>
    %101 = arith.maximumf %99, %100 : vector<32x16xf32>
    %c2_66 = arith.constant 2 : index
    %c0_67 = arith.constant 0 : index
    %c0_68 = arith.constant 0 : index
    %102 = vector.load %arg6[%c2_66, %c0_67, %c0_68] : memref<3x32x32xf32, #tpu.memory_space<vmem>>, vector<1x32x32xf32>
    %103 = vector.shape_cast %102 : vector<1x32x32xf32> to vector<32x32xf32>
    %cst_69 = arith.constant dense<0.000000e+00> : vector<32x16xf32>
    %104 = tpu.matmul %103, %101, %cst_69 {dimension_numbers = #tpu.dot_dimension_numbers<[1], [0], [0], [1], [0, 0, 1, 1], [], []>} : vector<32x32xf32>, vector<32x16xf32>, vector<32x16xf32> -> vector<32x16xf32>
    %c2_70 = arith.constant 2 : index
    %c0_71 = arith.constant 0 : index
    %c0_72 = arith.constant 0 : index
    %105 = vector.load %arg7[%c2_70, %c0_71, %c0_72] : memref<3x32x1xf32, #tpu.memory_space<vmem>>, vector<1x32x1xf32>
    %106 = vector.shape_cast %105 : vector<1x32x1xf32> to vector<32x1xf32>
    %107 = vector.broadcast %106 : vector<32x1xf32> to vector<32x16xf32>
    %108 = arith.addf %104, %107 : vector<32x16xf32>
    %109 = arith.addf %77, %108 : vector<32x16xf32>
    %c0_73 = arith.constant 0 : index
    %c0_74 = arith.constant 0 : index
    %110 = vector.load %arg11[%c0_73, %c0_74] : memref<32x16xf32, #tpu.memory_space<vmem>>, vector<32x16xf32>
    tpu.vector_store %arg11[%c0_73, %c0_74], %109 {strides = array<i32>} : memref<32x16xf32, #tpu.memory_space<vmem>>, vector<32x16xf32>,
    %c0_75 = arith.constant 0 : index
    %c0_76 = arith.constant 0 : index
    %111 = vector.load %arg8[%c0_75, %c0_76] : memref<8x32xf32, #tpu.memory_space<vmem>>, vector<8x32xf32>
    %c0_77 = arith.constant 0 : index
    %c0_78 = arith.constant 0 : index
    %112 = vector.load %arg11[%c0_77, %c0_78] : memref<32x16xf32, #tpu.memory_space<vmem>>, vector<32x16xf32>
    %cst_79 = arith.constant dense<0.000000e+00> : vector<8x16xf32>
    %113 = tpu.matmul %111, %112, %cst_79 {dimension_numbers = #tpu.dot_dimension_numbers<[1], [0], [0], [1], [0, 0, 1, 1], [], []>} : vector<8x32xf32>, vector<32x16xf32>, vector<8x16xf32> -> vector<8x16xf32>
    %c0_80 = arith.constant 0 : index
    %c0_81 = arith.constant 0 : index
    %114 = vector.load %arg9[%c0_80, %c0_81] : memref<8x1xf32, #tpu.memory_space<vmem>>, vector<8x1xf32>
    %115 = vector.broadcast %114 : vector<8x1xf32> to vector<8x16xf32>
    %116 = arith.addf %113, %115 : vector<8x16xf32>
    %c0_82 = arith.constant 0 : index
    %c0_83 = arith.constant 0 : index
    %c0_84 = arith.constant 0 : index
    %117 = vector.load %arg10[%c0_82, %c0_83, %c0_84] : memref<1x8x16xf32, #tpu.memory_space<vmem>>, vector<1x8x16xf32>
    %118 = vector.shape_cast %117 : vector<1x8x16xf32> to vector<8x16xf32>
    %119 = vector.shape_cast %116 : vector<8x16xf32> to vector<1x8x16xf32>
    tpu.vector_store %arg10[%c0_82, %c0_83, %c0_84], %119 {strides = array<i32>} : memref<1x8x16xf32, #tpu.memory_space<vmem>>, vector<1x8x16xf32>,
    return
  }
  func.func @transform_0(%arg0: i32) -> (i32, i32, i32) {
    %c0_i32 = arith.constant 0 : i32
    %c0_i32_0 = arith.constant 0 : i32
    %c0_i32_1 = arith.constant 0 : i32
    return %arg0, %c0_i32, %c0_i32_0 : i32, i32, i32
  }
  func.func @transform_1(%arg0: i32) -> (i32, i32) {
    %c0_i32 = arith.constant 0 : i32
    %c0_i32_0 = arith.constant 0 : i32
    %c0_i32_1 = arith.constant 0 : i32
    return %c0_i32, %c0_i32_0 : i32, i32
  }
  func.func @transform_2(%arg0: i32) -> (i32, i32) {
    %c0_i32 = arith.constant 0 : i32
    %c0_i32_0 = arith.constant 0 : i32
    %c0_i32_1 = arith.constant 0 : i32
    return %c0_i32, %c0_i32_0 : i32, i32
  }
  func.func @transform_3(%arg0: i32) -> (i32, i32, i32) {
    %c0_i32 = arith.constant 0 : i32
    %c0_i32_0 = arith.constant 0 : i32
    %c0_i32_1 = arith.constant 0 : i32
    %c0_i32_2 = arith.constant 0 : i32
    return %c0_i32, %c0_i32_0, %c0_i32_1 : i32, i32, i32
  }
  func.func @transform_4(%arg0: i32) -> (i32, i32, i32) {
    %c0_i32 = arith.constant 0 : i32
    %c0_i32_0 = arith.constant 0 : i32
    %c0_i32_1 = arith.constant 0 : i32
    %c0_i32_2 = arith.constant 0 : i32
    return %c0_i32, %c0_i32_0, %c0_i32_1 : i32, i32, i32
  }
  func.func @transform_5(%arg0: i32) -> (i32, i32, i32) {
    %c0_i32 = arith.constant 0 : i32
    %c0_i32_0 = arith.constant 0 : i32
    %c0_i32_1 = arith.constant 0 : i32
    %c0_i32_2 = arith.constant 0 : i32
    return %c0_i32, %c0_i32_0, %c0_i32_1 : i32, i32, i32
  }
  func.func @transform_6(%arg0: i32) -> (i32, i32, i32) {
    %c0_i32 = arith.constant 0 : i32
    %c0_i32_0 = arith.constant 0 : i32
    %c0_i32_1 = arith.constant 0 : i32
    %c0_i32_2 = arith.constant 0 : i32
    return %c0_i32, %c0_i32_0, %c0_i32_1 : i32, i32, i32
  }
  func.func @transform_7(%arg0: i32) -> (i32, i32) {
    %c0_i32 = arith.constant 0 : i32
    %c0_i32_0 = arith.constant 0 : i32
    %c0_i32_1 = arith.constant 0 : i32
    return %c0_i32, %c0_i32_0 : i32, i32
  }
  func.func @transform_8(%arg0: i32) -> (i32, i32) {
    %c0_i32 = arith.constant 0 : i32
    %c0_i32_0 = arith.constant 0 : i32
    %c0_i32_1 = arith.constant 0 : i32
    return %c0_i32, %c0_i32_0 : i32, i32
  }
  func.func @transform_9(%arg0: i32) -> (i32, i32, i32) {
    %c0_i32 = arith.constant 0 : i32
    %c0_i32_0 = arith.constant 0 : i32
    %c0_i32_1 = arith.constant 0 : i32
    return %arg0, %c0_i32, %c0_i32_0 : i32, i32, i32
  }
}

</mosaic_0001>

<llo_original>
// kernel: tpu_custom_call.1
$region0: #{tpu_custom_call.1}
  #allocation0 [shape = 'u32[]', space=smem, size = 0x4, offset = 0x4, fixed_abs, tag = 'smem constant byte address 0x4 - core index']
  #allocation1 [shape = 'u32[144,128]{1,0:T(1,128)}', space=vmem, size = 0x12000, scoped, tag = 'internal scratch']
  #allocation2 [shape = 'f32[32,16]{1,0:T(8,128)}', space=vmem, size = 0x4000, scoped, tag = 'scratch operand']
  %s0 = inlined_call_operand.vmem [shape: f32[2,16,16], index: 0, kind: input, shape index: {}]
  %s1 = inlined_call_operand.vmem [shape: f32[32,16], index: 1, kind: input, shape index: {}]
  %s2 = inlined_call_operand.vmem [shape: f32[32,1], index: 2, kind: input, shape index: {}]
  %s3 = inlined_call_operand.vmem [shape: f32[3,32,96], index: 3, kind: input, shape index: {}]
  %s4 = inlined_call_operand.vmem [shape: f32[3,32,1], index: 4, kind: input, shape index: {}]
  %s5 = inlined_call_operand.vmem [shape: f32[3,32,32], index: 5, kind: input, shape index: {}]
  %s6 = inlined_call_operand.vmem [shape: f32[3,32,1], index: 6, kind: input, shape index: {}]
  %s7 = inlined_call_operand.vmem [shape: f32[8,32], index: 7, kind: input, shape index: {}]
  %s8 = inlined_call_operand.vmem [shape: f32[8,1], index: 8, kind: input, shape index: {}]
  %s9 = inlined_call_operand.hbm [shape: f32[2,8,16], index: 9, kind: output, shape index: {}]
  %s10 = sld [smem:[#allocation0]]
  $region69: #{tpu_custom_call.1} parent=0
    _
  %s12 = ssub.s32 1, %s10
  %s13 = scalar_select 0, %s12, %s10
  $region1: #{tpu_custom_call.1} parent=0
    #allocation3 [shape = 'u8[8192]{0}', space=vmem, size = 0x2000, scoped, tag = 'output window, operand 0']
    #allocation4 [shape = 's32[2]{0}', space=sflag, size = 0x8, scoped, tag = 'scoped memory for tpu_custom_call.1']
    %14 = vsyncpa [#allocation4], 0
    %s15 = scalar_lea.sflag [#allocation4], 1
    %16 = vsyncpa %s15, 0
    loop: start=0, step=1, limit=4
    $region2: #{tpu_custom_call.1} parent=1 // loop_pre_header
      _
    $region3: #{tpu_custom_call.1} parent=1 // loop_header
      %s18 = sphi 0, %s22
      %p19 = scmp.ge.s32.totalorder %s18, 4
      %s28 = sphi 0, %s30
      %s31 = sphi 0, %s28
      %s32 = sphi 0, %s31
      %s48 = sphi 0, %s32
      %s52 = sphi 0, %s52
      %s54 = sphi 0, %s52
      %s55 = sphi 0, %s54
      %s69 = sphi 0, %s55
      %s73 = sphi 0, %s73
      %s75 = sphi 0, %s73
      %s76 = sphi 0, %s75
      %s90 = sphi 0, %s76
      %s94 = sphi 0, %s94
      %s96 = sphi 0, %s94
      %s97 = sphi 0, %s96
      %s111 = sphi 0, %s97
      %s115 = sphi 0, %s115
      %s117 = sphi 0, %s115
      %s118 = sphi 0, %s117
      %s132 = sphi 0, %s118
      %s136 = sphi 0, %s136
      %s138 = sphi 0, %s136
      %s139 = sphi 0, %s138
      %s153 = sphi 0, %s139
      %s157 = sphi 0, %s157
      %s159 = sphi 0, %s157
      %s160 = sphi 0, %s159
      %s174 = sphi 0, %s160
      %s178 = sphi 0, %s178
      %s180 = sphi 0, %s178
      %s181 = sphi 0, %s180
      %s195 = sphi 0, %s181
      %s199 = sphi 0, %s199
      %s201 = sphi 0, %s199
      %s202 = sphi 0, %s201
      %s216 = sphi 0, %s202
      %s222 = sphi 0, %s224
      %s225 = sphi 0, %s222
      %s226 = sphi 0, %s225
      %s242 = sphi 0, %s226
    $region4: #{tpu_custom_call.1} parent=1 // loop_header_branch
      %21 = sbr.rel (%p19) target = $region8
    $region5: #{tpu_custom_call.1} parent=1 // loop_body
      %s23 = ssub.s32 %s18, 1
      %s24 = ssub.s32 %s18, 2
      %s25 = sadd.s32 %s18, 1
      %s26 = ssub.s32 %s18, %s25
      %p27 = scmp.eq.s32.totalorder %s26, 0
      %s29 = sadd.s32 %s28, 1
      %s30 = scalar_select %p27, %s28, %s29
      %p33 = pneg %p27
      %p34 = scmp.eq.s32.totalorder %s18, 1
      %p35 = por %p33, %p34
      %p36 = scmp.ne.s32.totalorder %s28, %s31
      %p37 = scmp.eq.s32.totalorder %s18, 0
      %p38 = por %p36, %p37
      %p39 = scmp.ne.s32.totalorder %s28, %s31
      %p40 = scmp.eq.s32.totalorder %s23, 1
      %p41 = por %p39, %p40
      %p42 = scmp.ne.s32.totalorder %s31, %s32
      %p43 = scmp.eq.s32.totalorder %s23, 0
      %p44 = por %p42, %p43
      %p45 = scmp.ne.s32.totalorder %s31, %s32
      %p46 = scmp.eq.s32.totalorder %s24, 1
      %p47 = por %p45, %p46
      %p49 = scmp.ne.s32.totalorder %s32, %s48
      %p50 = scmp.eq.s32.totalorder %s24, 0
      %p51 = por %p49, %p50
      %s53 = sadd.s32 %s52, 1
      %p56 = scmp.eq.s32.totalorder %s18, 1
      %p57 = scmp.ne.s32.totalorder %s52, %s54
      %p58 = scmp.eq.s32.totalorder %s18, 0
      %p59 = por %p57, %p58
      %p60 = scmp.ne.s32.totalorder %s52, %s54
      %p61 = scmp.eq.s32.totalorder %s23, 1
      %p62 = por %p60, %p61
      %p63 = scmp.ne.s32.totalorder %s54, %s55
      %p64 = scmp.eq.s32.totalorder %s23, 0
      %p65 = por %p63, %p64
      %p66 = scmp.ne.s32.totalorder %s54, %s55
      %p67 = scmp.eq.s32.totalorder %s24, 1
      %p68 = por %p66, %p67
      %p70 = scmp.ne.s32.totalorder %s55, %s69
      %p71 = scmp.eq.s32.totalorder %s24, 0
      %p72 = por %p70, %p71
      %s74 = sadd.s32 %s73, 1
      %p77 = scmp.eq.s32.totalorder %s18, 1
      %p78 = scmp.ne.s32.totalorder %s73, %s75
      %p79 = scmp.eq.s32.totalorder %s18, 0
      %p80 = por %p78, %p79
      %p81 = scmp.ne.s32.totalorder %s73, %s75
      %p82 = scmp.eq.s32.totalorder %s23, 1
      %p83 = por %p81, %p82
      %p84 = scmp.ne.s32.totalorder %s75, %s76
      %p85 = scmp.eq.s32.totalorder %s23, 0
      %p86 = por %p84, %p85
      %p87 = scmp.ne.s32.totalorder %s75, %s76
      %p88 = scmp.eq.s32.totalorder %s24, 1
      %p89 = por %p87, %p88
      %p91 = scmp.ne.s32.totalorder %s76, %s90
      %p92 = scmp.eq.s32.totalorder %s24, 0
      %p93 = por %p91, %p92
      %s95 = sadd.s32 %s94, 1
      %p98 = scmp.eq.s32.totalorder %s18, 1
      %p99 = scmp.ne.s32.totalorder %s94, %s96
      %p100 = scmp.eq.s32.totalorder %s18, 0
      %p101 = por %p99, %p100
      %p102 = scmp.ne.s32.totalorder %s94, %s96
      %p103 = scmp.eq.s32.totalorder %s23, 1
      %p104 = por %p102, %p103
      %p105 = scmp.ne.s32.totalorder %s96, %s97
      %p106 = scmp.eq.s32.totalorder %s23, 0
      %p107 = por %p105, %p106
      %p108 = scmp.ne.s32.totalorder %s96, %s97
      %p109 = scmp.eq.s32.totalorder %s24, 1
      %p110 = por %p108, %p109
      %p112 = scmp.ne.s32.totalorder %s97, %s111
      %p113 = scmp.eq.s32.totalorder %s24, 0
      %p114 = por %p112, %p113
      %s116 = sadd.s32 %s115, 1
      %p119 = scmp.eq.s32.totalorder %s18, 1
      %p120 = scmp.ne.s32.totalorder %s115, %s117
      %p121 = scmp.eq.s32.totalorder %s18, 0
      %p122 = por %p120, %p121
      %p123 = scmp.ne.s32.totalorder %s115, %s117
      %p124 = scmp.eq.s32.totalorder %s23, 1
      %p125 = por %p123, %p124
      %p126 = scmp.ne.s32.totalorder %s117, %s118
      %p127 = scmp.eq.s32.totalorder %s23, 0
      %p128 = por %p126, %p127
      %p129 = scmp.ne.s32.totalorder %s117, %s118
      %p130 = scmp.eq.s32.totalorder %s24, 1
      %p131 = por %p129, %p130
      %p133 = scmp.ne.s32.totalorder %s118, %s132
      %p134 = scmp.eq.s32.totalorder %s24, 0
      %p135 = por %p133, %p134
      %s137 = sadd.s32 %s136, 1
      %p140 = scmp.eq.s32.totalorder %s18, 1
      %p141 = scmp.ne.s32.totalorder %s136, %s138
      %p142 = scmp.eq.s32.totalorder %s18, 0
      %p143 = por %p141, %p142
      %p144 = scmp.ne.s32.totalorder %s136, %s138
      %p145 = scmp.eq.s32.totalorder %s23, 1
      %p146 = por %p144, %p145
      %p147 = scmp.ne.s32.totalorder %s138, %s139
      %p148 = scmp.eq.s32.totalorder %s23, 0
      %p149 = por %p147, %p148
      %p150 = scmp.ne.s32.totalorder %s138, %s139
      %p151 = scmp.eq.s32.totalorder %s24, 1
      %p152 = por %p150, %p151
      %p154 = scmp.ne.s32.totalorder %s139, %s153
      %p155 = scmp.eq.s32.totalorder %s24, 0
      %p156 = por %p154, %p155
      %s158 = sadd.s32 %s157, 1
      %p161 = scmp.eq.s32.totalorder %s18, 1
      %p162 = scmp.ne.s32.totalorder %s157, %s159
      %p163 = scmp.eq.s32.totalorder %s18, 0
      %p164 = por %p162, %p163
      %p165 = scmp.ne.s32.totalorder %s157, %s159
      %p166 = scmp.eq.s32.totalorder %s23, 1
      %p167 = por %p165, %p166
      %p168 = scmp.ne.s32.totalorder %s159, %s160
      %p169 = scmp.eq.s32.totalorder %s23, 0
      %p170 = por %p168, %p169
      %p171 = scmp.ne.s32.totalorder %s159, %s160
      %p172 = scmp.eq.s32.totalorder %s24, 1
      %p173 = por %p171, %p172
      %p175 = scmp.ne.s32.totalorder %s160, %s174
      %p176 = scmp.eq.s32.totalorder %s24, 0
      %p177 = por %p175, %p176
      %s179 = sadd.s32 %s178, 1
      %p182 = scmp.eq.s32.totalorder %s18, 1
      %p183 = scmp.ne.s32.totalorder %s178, %s180
      %p184 = scmp.eq.s32.totalorder %s18, 0
      %p185 = por %p183, %p184
      %p186 = scmp.ne.s32.totalorder %s178, %s180
      %p187 = scmp.eq.s32.totalorder %s23, 1
      %p188 = por %p186, %p187
      %p189 = scmp.ne.s32.totalorder %s180, %s181
      %p190 = scmp.eq.s32.totalorder %s23, 0
      %p191 = por %p189, %p190
      %p192 = scmp.ne.s32.totalorder %s180, %s181
      %p193 = scmp.eq.s32.totalorder %s24, 1
      %p194 = por %p192, %p193
      %p196 = scmp.ne.s32.totalorder %s181, %s195
      %p197 = scmp.eq.s32.totalorder %s24, 0
      %p198 = por %p196, %p197
      %s200 = sadd.s32 %s199, 1
      %p203 = scmp.eq.s32.totalorder %s18, 1
      %p204 = scmp.ne.s32.totalorder %s199, %s201
      %p205 = scmp.eq.s32.totalorder %s18, 0
      %p206 = por %p204, %p205
      %p207 = scmp.ne.s32.totalorder %s199, %s201
      %p208 = scmp.eq.s32.totalorder %s23, 1
      %p209 = por %p207, %p208
      %p210 = scmp.ne.s32.totalorder %s201, %s202
      %p211 = scmp.eq.s32.totalorder %s23, 0
      %p212 = por %p210, %p211
      %p213 = scmp.ne.s32.totalorder %s201, %s202
      %p214 = scmp.eq.s32.totalorder %s24, 1
      %p215 = por %p213, %p214
      %p217 = scmp.ne.s32.totalorder %s202, %s216
      %p218 = scmp.eq.s32.totalorder %s24, 0
      %p219 = por %p217, %p218
      %s220 = ssub.s32 %s18, %s25
      %p221 = scmp.eq.s32.totalorder %s220, 0
      %s223 = sadd.s32 %s222, 1
      %s224 = scalar_select %p221, %s222, %s223
      %p227 = pneg %p221
      %p228 = scmp.eq.s32.totalorder %s18, 1
      %p229 = por %p227, %p228
      %p230 = scmp.ne.s32.totalorder %s222, %s225
      %p231 = scmp.eq.s32.totalorder %s18, 0
      %p232 = por %p230, %p231
      %p233 = scmp.ne.s32.totalorder %s222, %s225
      %p234 = scmp.eq.s32.totalorder %s23, 1
      %p235 = por %p233, %p234
      %p236 = scmp.ne.s32.totalorder %s225, %s226
      %p237 = scmp.eq.s32.totalorder %s23, 0
      %p238 = por %p236, %p237
      %p239 = scmp.ne.s32.totalorder %s225, %s226
      %p240 = scmp.eq.s32.totalorder %s24, 1
      %p241 = por %p239, %p240
      %p243 = scmp.ne.s32.totalorder %s226, %s242
      %p244 = scmp.eq.s32.totalorder %s24, 0
      %p245 = por %p243, %p244
      %p246 = scmp.le.s32.totalorder 1, %s18
      %p247 = scmp.lt.s32.totalorder %s18, 3
      %p248 = pnand %p246, %p247
      %p249 = pneg %p248
      // Predicated region
      $region9: #{tpu_custom_call.1} parent=5 // pred_check
        _
      $region10: #{tpu_custom_call.1} parent=5 // pred_check_branch
        %251 = sbr.rel (%p248) target = $region12
      $region11: #{tpu_custom_call.1} parent=5 // pred_region
        %s252 = ssub.s32 %s18, 1
        // Predicated region
        $region13: #{tpu_custom_call.1} parent=11 // pred_check
          %p253 = pneg %p65
        $region14: #{tpu_custom_call.1} parent=11 // pred_check_branch
          %255 = sbr.rel (%p253) target = $region16
        $region15: #{tpu_custom_call.1} parent=11 // pred_region
          _
        $region16: #{tpu_custom_call.1} parent=11 // pred_fallthru
          _
        // Predicated region
        $region17: #{tpu_custom_call.1} parent=11 // pred_check
          %p256 = pneg %p86
        $region18: #{tpu_custom_call.1} parent=11 // pred_check_branch
          %258 = sbr.rel (%p256) target = $region20
        $region19: #{tpu_custom_call.1} parent=11 // pred_region
          _
        $region20: #{tpu_custom_call.1} parent=11 // pred_fallthru
          _
        // Predicated region
        $region21: #{tpu_custom_call.1} parent=11 // pred_check
          %p259 = pneg %p107
        $region22: #{tpu_custom_call.1} parent=11 // pred_check_branch
          %261 = sbr.rel (%p259) target = $region24
        $region23: #{tpu_custom_call.1} parent=11 // pred_region
          _
        $region24: #{tpu_custom_call.1} parent=11 // pred_fallthru
          _
        // Predicated region
        $region25: #{tpu_custom_call.1} parent=11 // pred_check
          %p262 = pneg %p128
        $region26: #{tpu_custom_call.1} parent=11 // pred_check_branch
          %264 = sbr.rel (%p262) target = $region28
        $region27: #{tpu_custom_call.1} parent=11 // pred_region
          _
        $region28: #{tpu_custom_call.1} parent=11 // pred_fallthru
          _
        // Predicated region
        $region29: #{tpu_custom_call.1} parent=11 // pred_check
          %p265 = pneg %p149
        $region30: #{tpu_custom_call.1} parent=11 // pred_check_branch
          %267 = sbr.rel (%p265) target = $region32
        $region31: #{tpu_custom_call.1} parent=11 // pred_region
          _
        $region32: #{tpu_custom_call.1} parent=11 // pred_fallthru
          _
        // Predicated region
        $region33: #{tpu_custom_call.1} parent=11 // pred_check
          %p268 = pneg %p170
        $region34: #{tpu_custom_call.1} parent=11 // pred_check_branch
          %270 = sbr.rel (%p268) target = $region36
        $region35: #{tpu_custom_call.1} parent=11 // pred_region
          _
        $region36: #{tpu_custom_call.1} parent=11 // pred_fallthru
          _
        // Predicated region
        $region37: #{tpu_custom_call.1} parent=11 // pred_check
          %p271 = pneg %p191
        $region38: #{tpu_custom_call.1} parent=11 // pred_check_branch
          %273 = sbr.rel (%p271) target = $region40
        $region39: #{tpu_custom_call.1} parent=11 // pred_region
          _
        $region40: #{tpu_custom_call.1} parent=11 // pred_fallthru
          _
        // Predicated region
        $region41: #{tpu_custom_call.1} parent=11 // pred_check
          %p274 = pneg %p212
        $region42: #{tpu_custom_call.1} parent=11 // pred_check_branch
          %276 = sbr.rel (%p274) target = $region44
        $region43: #{tpu_custom_call.1} parent=11 // pred_region
          _
        $region44: #{tpu_custom_call.1} parent=11 // pred_fallthru
          _
      $region12: #{tpu_custom_call.1} parent=5 // pred_fallthru
        _
      %p277 = scmp.lt.s32.totalorder %s18, 2
      // Predicated region
      $region45: #{tpu_custom_call.1} parent=5 // pred_check
        %p278 = pneg %p277
      $region46: #{tpu_custom_call.1} parent=5 // pred_check_branch
        %280 = sbr.rel (%p278) target = $region48
      $region47: #{tpu_custom_call.1} parent=5 // pred_region
        // Predicated region
        $region49: #{tpu_custom_call.1} parent=47 // pred_check
          %p281 = pneg %p38
        $region50: #{tpu_custom_call.1} parent=47 // pred_check_branch
          %283 = sbr.rel (%p281) target = $region52
        $region51: #{tpu_custom_call.1} parent=47 // pred_region
          %p284 = scmp.lt.s32.totalorder %s18, 1
          %s285 = scalar_select %p284, %s18, 1
          %s286 = smul.addr %s285, 2
          %s287 = smul.addr %s286, 8
          %s288 = scalar_lea.vmem %s0, %s287
        $region52: #{tpu_custom_call.1} parent=47 // pred_fallthru
          _
      $region48: #{tpu_custom_call.1} parent=5 // pred_fallthru
        _
      %p289 = scmp.le.s32.totalorder 1, %s18
      %p290 = scmp.lt.s32.totalorder %s18, 3
      %p291 = pnand %p289, %p290
      %p292 = pneg %p291
      // Predicated region
      $region53: #{tpu_custom_call.1} parent=5 // pred_check
        _
      $region54: #{tpu_custom_call.1} parent=5 // pred_check_branch
        %294 = sbr.rel (%p291) target = $region56
      $region55: #{tpu_custom_call.1} parent=5 // pred_region
        %s295 = ssub.s32 %s18, 1
        %p296 = scmp.lt.s32.totalorder %s23, 1
        %s297 = scalar_select %p296, %s23, 1
        %s298 = smul.addr %s297, 2
        %s299 = smul.addr %s298, 8
        %s300 = scalar_lea.vmem %s0, %s299
        %p301 = pneg %p44
        %p302 = pneg %p41
        %p303 = pneg %p65
        %p304 = pneg %p62
        %p305 = pneg %p86
        %p306 = pneg %p83
        %p307 = pneg %p107
        %p308 = pneg %p104
        %p309 = pneg %p128
        %p310 = pneg %p125
        %p311 = pneg %p149
        %p312 = pneg %p146
        %p313 = pneg %p170
        %p314 = pneg %p167
        %p315 = pneg %p191
        %p316 = pneg %p188
        %p317 = pneg %p212
        %p318 = pneg %p209
        %p319 = pneg %p238
        %p320 = pneg %p235
        %s321 = sand.u32 %s225, 1
        %s322 = scalar_lea.sflag [#allocation4], %s321
        %s323 = sand.u32 %s225, 1
        %s324 = smul.addr %s323, 8
        %s325 = scalar_lea.vmem [#allocation3], %s324
        %p326 = scmp.lt.s32.totalorder %s23, 1
        %s327 = scalar_select %p326, %s23, 1
        %s328 = smul.addr %s327, 2
        %s329 = smul.addr %s328, 8
        %s330 = scalar_lea.vmem %s0, %s329
        %v331 = vld [vmem:[%s330] sm:$0xff]
        %v332 = vld [vmem:[%s330 + $0x8] sm:$0xff]
        %v333 = vld [vmem:[%s1] sm:$0xff]
        %v334 = vld [vmem:[%s1 + $0x8] sm:$0xff]
        %v335 = vld [vmem:[%s1 + $0x10] sm:$0xff]
        %v336 = vld [vmem:[%s1 + $0x18] sm:$0xff]
        %v337 = vld [vmem:[%s2] sm:$0xff]
        %v338 = vld [vmem:[%s2 + $0x8] sm:$0xff]
        %v339 = vld [vmem:[%s2 + $0x10] sm:$0xff]
        %v340 = vld [vmem:[%s2 + $0x18] sm:$0xff]
        %342 = vset.pattern.permute.xlu0 0
        %343 = vperm.xlu0 %342, %v337
        %v344 = vpop.permute.xlu0 %343
        %347 = vset.pattern.permute.xlu0 0
        %348 = vperm.xlu0 %347, %v338
        %v349 = vpop.permute.xlu0 %348
        %352 = vset.pattern.permute.xlu0 0
        %353 = vperm.xlu0 %352, %v339
        %v354 = vpop.permute.xlu0 %353
        %357 = vset.pattern.permute.xlu0 0
        %358 = vperm.xlu0 %357, %v340
        %v359 = vpop.permute.xlu0 %358
        %vm361 = vcmask 130048
        %v363 = vsel %vm361, %v333, 0
        %v366 = vsel %vm361, %v334, 0
        %v369 = vsel %vm361, %v335, 0
        %v372 = vsel %vm361, %v336, 0
        %374 = vmatprep.subr.mxu0 0.0
        %375 = vmatpush1.msra.mxu0 0.0
        %376 = vmatprep.subr.mxu0 0.0
        %377 = vmatpush1.msra.mxu0 0.0
        %378 = vmatprep.subr.mxu0 0.0
        %379 = vmatpush1.msra.mxu0 0.0
        %380 = vmatprep.subr.mxu0 0.0
        %381 = vmatpush1.msra.mxu0 0.0
        %382 = vmatprep.subr.mxu0 0.0
        %383 = vmatpush1.msra.mxu0 0.0
        %384 = vmatprep.subr.mxu0 0.0
        %385 = vmatpush1.msra.mxu0 0.0
        %386 = vmatprep.subr.mxu0 0.0
        %387 = vmatpush1.msra.mxu0 0.0
        %388 = vmatprep.subr.mxu0 0.0
        %389 = vmatpush1.msra.mxu0 0.0
        %390 = vmatprep.subr.mxu0 0.0
        %391 = vmatpush1.msra.mxu0 0.0
        %392 = vmatprep.subr.mxu0 0.0
        %393 = vmatpush1.msra.mxu0 0.0
        %394 = vmatprep.subr.mxu0 0.0
        %395 = vmatpush1.msra.mxu0 0.0
        %396 = vmatprep.subr.mxu0 0.0
        %397 = vmatpush1.msra.mxu0 0.0
        %398 = vmatprep.subr.mxu0 0.0
        %399 = vmatpush1.msra.mxu0 0.0
        %400 = vmatprep.subr.mxu0 0.0
        %401 = vmatpush1.msra.mxu0 0.0
        %402 = vmatprep.subr.mxu0 0.0
        %403 = vmatpush1.msra.mxu0 %v332
        %404 = vmatprep.subr.mxu0 0.0
        %405 = vmatpush1.msra.mxu0 %v331
        %406 = vmatprep.subr.mxu0 0.0
        %407 = vmatpush2.msra.mxu0 0.0
        %408 = vmatprep.subr.mxu0 0.0
        %409 = vmatpush2.msra.mxu0 0.0
        %410 = vmatprep.subr.mxu0 0.0
        %411 = vmatpush2.msra.mxu0 0.0
        %412 = vmatprep.subr.mxu0 0.0
        %413 = vmatpush2.msra.mxu0 0.0
        %414 = vmatprep.subr.mxu0 0.0
        %415 = vmatpush2.msra.mxu0 0.0
        %416 = vmatprep.subr.mxu0 0.0
        %417 = vmatpush2.msra.mxu0 0.0
        %418 = vmatprep.subr.mxu0 0.0
        %419 = vmatpush2.msra.mxu0 0.0
        %420 = vmatprep.subr.mxu0 0.0
        %421 = vmatpush2.msra.mxu0 0.0
        %422 = vmatprep.subr.mxu0 0.0
        %423 = vmatpush2.msra.mxu0 0.0
        %424 = vmatprep.subr.mxu0 0.0
        %425 = vmatpush2.msra.mxu0 0.0
        %426 = vmatprep.subr.mxu0 0.0
        %427 = vmatpush2.msra.mxu0 0.0
        %428 = vmatprep.subr.mxu0 0.0
        %429 = vmatpush2.msra.mxu0 0.0
        %430 = vmatprep.subr.mxu0 0.0
        %431 = vmatpush2.msra.mxu0 0.0
        %432 = vmatprep.subr.mxu0 0.0
        %433 = vmatpush2.msra.mxu0 0.0
        %434 = vmatprep.subr.mxu0 0.0
        %435 = vmatpush2.msra.mxu0 0.0
        %436 = vmatprep.subr.mxu0 0.0
        %437 = vmatpush2.msra.mxu0 0.0
        %438 = vmatprep.mubr.f32.mxu0 0.0
        %439 = vmatmul.mubr.f32.gmra.mxu0 %v363
        %v440 = vpop.f32.mrf.mxu0
        %v441 = vadd.f32 %v344, %v440
        %v442 = vpop.f32.mrf.mxu0
        %443 = vmatprep.mubr.f32.mxu0 0.0
        %444 = vmatmul.mubr.f32.gmra.mxu0 %v366
        %v445 = vpop.f32.mrf.mxu0
        %v446 = vadd.f32 %v349, %v445
        %v447 = vpop.f32.mrf.mxu0
        %448 = vmatprep.mubr.f32.mxu0 0.0
        %449 = vmatmul.mubr.f32.gmra.mxu0 %v369
        %v450 = vpop.f32.mrf.mxu0
        %v451 = vadd.f32 %v354, %v450
        %v452 = vpop.f32.mrf.mxu0
        %453 = vmatprep.mubr.f32.mxu0 0.0
        %454 = vmatmul.mubr.f32.gmra.mxu0 %v372
        %v455 = vpop.f32.mrf.mxu0
        %v456 = vadd.f32 %v359, %v455
        %v457 = vpop.f32.mrf.mxu0
        %458 = vdwg.mxu0
        %459 = vst.msk [vmem:[#allocation2] sm:$0xff] %vm361, %v441
        %460 = vst.msk [vmem:[#allocation2 + $0x8] sm:$0xff] %vm361, %v446
        %461 = vst.msk [vmem:[#allocation2 + $0x10] sm:$0xff] %vm361, %v451
        %462 = vst.msk [vmem:[#allocation2 + $0x18] sm:$0xff] %vm361, %v456
        %v463 = vlaneseq
        %v464 = vand.u32 %v463, 127
        %v465 = vld [vmem:[#allocation2] sm:$0xff]
        %v466 = vld [vmem:[#allocation2 + $0x8] sm:$0xff]
        %v467 = vld [vmem:[#allocation2 + $0x10] sm:$0xff]
        %v468 = vld [vmem:[#allocation2 + $0x18] sm:$0xff]
        %vm469 = vcmask 1047680
        %470 = vrot.lane.b32.xlu0 %v465, 16
        %v471 = vpop.permute.xlu0 %470
        %v472 = vsel %vm469, %v471, %v465
        %473 = vrot.lane.b32.xlu0 %v466, 16
        %v474 = vpop.permute.xlu0 %473
        %v475 = vsel %vm469, %v474, %v466
        %476 = vrot.lane.b32.xlu0 %v467, 16
        %v477 = vpop.permute.xlu0 %476
        %v478 = vsel %vm469, %v477, %v467
        %479 = vrot.lane.b32.xlu0 %v468, 16
        %v480 = vpop.permute.xlu0 %479
        %v481 = vsel %vm469, %v480, %v468
        %482 = vrot.lane.b32.xlu0 %v472, 16
        %v483 = vpop.permute.xlu0 %482
        %484 = vrot.lane.b32.xlu0 %v475, 16
        %v485 = vpop.permute.xlu0 %484
        %486 = vrot.lane.b32.xlu0 %v478, 16
        %v487 = vpop.permute.xlu0 %486
        %488 = vrot.lane.b32.xlu0 %v481, 16
        %v489 = vpop.permute.xlu0 %488
        %v490 = vsel %vm469, %v483, %v465
        %v491 = vsel %vm469, %v485, %v466
        %v492 = vsel %vm469, %v487, %v467
        %v493 = vsel %vm469, %v489, %v468
        %vm494 = vcmp.ge.s32.totalorder %v464, 1
        %v495 = vsel %vm494, 1, 0
        %vm496 = vcmp.eq.s32.totalorder %v495, 1
        %501 = vrot.lane.b32.xlu0 %v490, 113
        %v502 = vpop.permute.xlu0 %501
        %503 = vrot.lane.b32.xlu0 %v491, 113
        %v504 = vpop.permute.xlu0 %503
        %505 = vrot.lane.b32.xlu0 %v492, 113
        %v506 = vpop.permute.xlu0 %505
        %507 = vrot.lane.b32.xlu0 %v493, 113
        %v508 = vpop.permute.xlu0 %507
        %v513 = vsel %vm496, %v502, 0.0
        %v514 = vsel %vm496, %v504, 0.0
        %v515 = vsel %vm496, %v506, 0.0
        %v516 = vsel %vm496, %v508, 0.0
        %vm517 = vcmp.lt.s32.totalorder %v464, 15
        %v518 = vsel %vm517, 1, 0
        %vm519 = vcmp.eq.s32.totalorder %v518, 1
        %520 = vrot.lane.b32.xlu0 %v490, 127
        %v521 = vpop.permute.xlu0 %520
        %522 = vrot.lane.b32.xlu0 %v491, 127
        %v523 = vpop.permute.xlu0 %522
        %524 = vrot.lane.b32.xlu0 %v492, 127
        %v525 = vpop.permute.xlu0 %524
        %526 = vrot.lane.b32.xlu0 %v493, 127
        %v527 = vpop.permute.xlu0 %526
        %v532 = vsel %vm519, %v521, 0.0
        %v533 = vsel %vm519, %v523, 0.0
        %v534 = vsel %vm519, %v525, 0.0
        %v535 = vsel %vm519, %v527, 0.0
        %v536 = vld [vmem:[%s3] sm:$0xff]
        %v537 = vld [vmem:[%s3 + $0x8] sm:$0xff]
        %v538 = vld [vmem:[%s3 + $0x10] sm:$0xff]
        %v539 = vld [vmem:[%s3 + $0x18] sm:$0xff]
        %v540 = vld [vmem:[%s4] sm:$0xff]
        %v541 = vld [vmem:[%s4 + $0x8] sm:$0xff]
        %v542 = vld [vmem:[%s4 + $0x10] sm:$0xff]
        %v543 = vld [vmem:[%s4 + $0x18] sm:$0xff]
        %545 = vset.pattern.permute.xlu0 0
        %546 = vperm.xlu0 %545, %v540
        %v547 = vpop.permute.xlu0 %546
        %550 = vset.pattern.permute.xlu0 0
        %551 = vperm.xlu0 %550, %v541
        %v552 = vpop.permute.xlu0 %551
        %555 = vset.pattern.permute.xlu0 0
        %556 = vperm.xlu0 %555, %v542
        %v557 = vpop.permute.xlu0 %556
        %560 = vset.pattern.permute.xlu0 0
        %561 = vperm.xlu0 %560, %v543
        %v562 = vpop.permute.xlu0 %561
        %vm564 = vcmask 785408
        %v566 = vsel %vm564, %v536, 0
        %v569 = vsel %vm564, %v537, 0
        %v572 = vsel %vm564, %v538, 0
        %v575 = vsel %vm564, %v539, 0
        %577 = vmatprep.subr.mxu0 0.0
        %578 = vmatpush1.msra.mxu0 0.0
        %579 = vmatprep.subr.mxu0 0.0
        %580 = vmatpush1.msra.mxu0 0.0
        %581 = vmatprep.subr.mxu0 0.0
        %582 = vmatpush1.msra.mxu0 0.0
        %583 = vmatprep.subr.mxu0 0.0
        %584 = vmatpush1.msra.mxu0 0.0
        %585 = vmatprep.subr.mxu0 0.0
        %586 = vmatpush1.msra.mxu0 %v535
        %587 = vmatprep.subr.mxu0 0.0
        %588 = vmatpush1.msra.mxu0 %v534
        %589 = vmatprep.subr.mxu0 0.0
        %590 = vmatpush1.msra.mxu0 %v533
        %591 = vmatprep.subr.mxu0 0.0
        %592 = vmatpush1.msra.mxu0 %v532
        %593 = vmatprep.subr.mxu0 0.0
        %594 = vmatpush1.msra.mxu0 %v468
        %595 = vmatprep.subr.mxu0 0.0
        %596 = vmatpush1.msra.mxu0 %v467
        %597 = vmatprep.subr.mxu0 0.0
        %598 = vmatpush1.msra.mxu0 %v466
        %599 = vmatprep.subr.mxu0 0.0
        %600 = vmatpush1.msra.mxu0 %v465
        %601 = vmatprep.subr.mxu0 0.0
        %602 = vmatpush1.msra.mxu0 %v516
        %603 = vmatprep.subr.mxu0 0.0
        %604 = vmatpush1.msra.mxu0 %v515
        %605 = vmatprep.subr.mxu0 0.0
        %606 = vmatpush1.msra.mxu0 %v514
        %607 = vmatprep.subr.mxu0 0.0
        %608 = vmatpush1.msra.mxu0 %v513
        %609 = vmatprep.subr.mxu0 0.0
        %610 = vmatpush2.msra.mxu0 0.0
        %611 = vmatprep.subr.mxu0 0.0
        %612 = vmatpush2.msra.mxu0 0.0
        %613 = vmatprep.subr.mxu0 0.0
        %614 = vmatpush2.msra.mxu0 0.0
        %615 = vmatprep.subr.mxu0 0.0
        %616 = vmatpush2.msra.mxu0 0.0
        %617 = vmatprep.subr.mxu0 0.0
        %618 = vmatpush2.msra.mxu0 0.0
        %619 = vmatprep.subr.mxu0 0.0
        %620 = vmatpush2.msra.mxu0 0.0
        %621 = vmatprep.subr.mxu0 0.0
        %622 = vmatpush2.msra.mxu0 0.0
        %623 = vmatprep.subr.mxu0 0.0
        %624 = vmatpush2.msra.mxu0 0.0
        %625 = vmatprep.subr.mxu0 0.0
        %626 = vmatpush2.msra.mxu0 0.0
        %627 = vmatprep.subr.mxu0 0.0
        %628 = vmatpush2.msra.mxu0 0.0
        %629 = vmatprep.subr.mxu0 0.0
        %630 = vmatpush2.msra.mxu0 0.0
        %631 = vmatprep.subr.mxu0 0.0
        %632 = vmatpush2.msra.mxu0 0.0
        %633 = vmatprep.subr.mxu0 0.0
        %634 = vmatpush2.msra.mxu0 0.0
        %635 = vmatprep.subr.mxu0 0.0
        %636 = vmatpush2.msra.mxu0 0.0
        %637 = vmatprep.subr.mxu0 0.0
        %638 = vmatpush2.msra.mxu0 0.0
        %639 = vmatprep.subr.mxu0 0.0
        %640 = vmatpush2.msra.mxu0 0.0
        %641 = vmatprep.mubr.f32.mxu0 0.0
        %642 = vmatmul.mubr.f32.gmra.mxu0 %v566
        %v643 = vpop.f32.mrf.mxu0
        %v644 = vadd.f32 %v547, %v643
        %v645 = vpop.f32.mrf.mxu0
        %646 = vmatprep.mubr.f32.mxu0 0.0
        %647 = vmatmul.mubr.f32.gmra.mxu0 %v569
        %v648 = vpop.f32.mrf.mxu0
        %v649 = vadd.f32 %v552, %v648
        %v650 = vpop.f32.mrf.mxu0
        %651 = vmatprep.mubr.f32.mxu0 0.0
        %652 = vmatmul.mubr.f32.gmra.mxu0 %v572
        %v653 = vpop.f32.mrf.mxu0
        %v654 = vadd.f32 %v557, %v653
        %v655 = vpop.f32.mrf.mxu0
        %656 = vmatprep.mubr.f32.mxu0 0.0
        %657 = vmatmul.mubr.f32.gmra.mxu0 %v575
        %v658 = vpop.f32.mrf.mxu0
        %v659 = vadd.f32 %v562, %v658
        %v660 = vpop.f32.mrf.mxu0
        %661 = vdwg.mxu0
        %v662 = vmax.f32 %v644, 0.0
        %v663 = vmax.f32 %v649, 0.0
        %v664 = vmax.f32 %v654, 0.0
        %v665 = vmax.f32 %v659, 0.0
        %v666 = vld [vmem:[%s5] sm:$0xff]
        %v667 = vld [vmem:[%s5 + $0x8] sm:$0xff]
        %v668 = vld [vmem:[%s5 + $0x10] sm:$0xff]
        %v669 = vld [vmem:[%s5 + $0x18] sm:$0xff]
        %v670 = vld [vmem:[%s6] sm:$0xff]
        %v671 = vld [vmem:[%s6 + $0x8] sm:$0xff]
        %v672 = vld [vmem:[%s6 + $0x10] sm:$0xff]
        %v673 = vld [vmem:[%s6 + $0x18] sm:$0xff]
        %675 = vset.pattern.permute.xlu0 0
        %676 = vperm.xlu0 %675, %v670
        %v677 = vpop.permute.xlu0 %676
        %680 = vset.pattern.permute.xlu0 0
        %681 = vperm.xlu0 %680, %v671
        %v682 = vpop.permute.xlu0 %681
        %685 = vset.pattern.permute.xlu0 0
        %686 = vperm.xlu0 %685, %v672
        %v687 = vpop.permute.xlu0 %686
        %690 = vset.pattern.permute.xlu0 0
        %691 = vperm.xlu0 %690, %v673
        %v692 = vpop.permute.xlu0 %691
        %vm694 = vcmask 261120
        %v696 = vsel %vm694, %v666, 0
        %v699 = vsel %vm694, %v667, 0
        %v702 = vsel %vm694, %v668, 0
        %v705 = vsel %vm694, %v669, 0
        %707 = vmatprep.subr.mxu0 0.0
        %708 = vmatpush1.msra.mxu0 0.0
        %709 = vmatprep.subr.mxu0 0.0
        %710 = vmatpush1.msra.mxu0 0.0
        %711 = vmatprep.subr.mxu0 0.0
        %712 = vmatpush1.msra.mxu0 0.0
        %713 = vmatprep.subr.mxu0 0.0
        %714 = vmatpush1.msra.mxu0 0.0
        %715 = vmatprep.subr.mxu0 0.0
        %716 = vmatpush1.msra.mxu0 0.0
        %717 = vmatprep.subr.mxu0 0.0
        %718 = vmatpush1.msra.mxu0 0.0
        %719 = vmatprep.subr.mxu0 0.0
        %720 = vmatpush1.msra.mxu0 0.0
        %721 = vmatprep.subr.mxu0 0.0
        %722 = vmatpush1.msra.mxu0 0.0
        %723 = vmatprep.subr.mxu0 0.0
        %724 = vmatpush1.msra.mxu0 0.0
        %725 = vmatprep.subr.mxu0 0.0
        %726 = vmatpush1.msra.mxu0 0.0
        %727 = vmatprep.subr.mxu0 0.0
        %728 = vmatpush1.msra.mxu0 0.0
        %729 = vmatprep.subr.mxu0 0.0
        %730 = vmatpush1.msra.mxu0 0.0
        %731 = vmatprep.subr.mxu0 0.0
        %732 = vmatpush1.msra.mxu0 %v665
        %733 = vmatprep.subr.mxu0 0.0
        %734 = vmatpush1.msra.mxu0 %v664
        %735 = vmatprep.subr.mxu0 0.0
        %736 = vmatpush1.msra.mxu0 %v663
        %737 = vmatprep.subr.mxu0 0.0
        %738 = vmatpush1.msra.mxu0 %v662
        %739 = vmatprep.subr.mxu0 0.0
        %740 = vmatpush2.msra.mxu0 0.0
        %741 = vmatprep.subr.mxu0 0.0
        %742 = vmatpush2.msra.mxu0 0.0
        %743 = vmatprep.subr.mxu0 0.0
        %744 = vmatpush2.msra.mxu0 0.0
        %745 = vmatprep.subr.mxu0 0.0
        %746 = vmatpush2.msra.mxu0 0.0
        %747 = vmatprep.subr.mxu0 0.0
        %748 = vmatpush2.msra.mxu0 0.0
        %749 = vmatprep.subr.mxu0 0.0
        %750 = vmatpush2.msra.mxu0 0.0
        %751 = vmatprep.subr.mxu0 0.0
        %752 = vmatpush2.msra.mxu0 0.0
        %753 = vmatprep.subr.mxu0 0.0
        %754 = vmatpush2.msra.mxu0 0.0
        %755 = vmatprep.subr.mxu0 0.0
        %756 = vmatpush2.msra.mxu0 0.0
        %757 = vmatprep.subr.mxu0 0.0
        %758 = vmatpush2.msra.mxu0 0.0
        %759 = vmatprep.subr.mxu0 0.0
        %760 = vmatpush2.msra.mxu0 0.0
        %761 = vmatprep.subr.mxu0 0.0
        %762 = vmatpush2.msra.mxu0 0.0
        %763 = vmatprep.subr.mxu0 0.0
        %764 = vmatpush2.msra.mxu0 0.0
        %765 = vmatprep.subr.mxu0 0.0
        %766 = vmatpush2.msra.mxu0 0.0
        %767 = vmatprep.subr.mxu0 0.0
        %768 = vmatpush2.msra.mxu0 0.0
        %769 = vmatprep.subr.mxu0 0.0
        %770 = vmatpush2.msra.mxu0 0.0
        %771 = vmatprep.mubr.f32.mxu0 0.0
        %772 = vmatmul.mubr.f32.gmra.mxu0 %v696
        %v773 = vpop.f32.mrf.mxu0
        %v774 = vadd.f32 %v677, %v773
        %v775 = vpop.f32.mrf.mxu0
        %776 = vmatprep.mubr.f32.mxu0 0.0
        %777 = vmatmul.mubr.f32.gmra.mxu0 %v699
        %v778 = vpop.f32.mrf.mxu0
        %v779 = vadd.f32 %v682, %v778
        %v780 = vpop.f32.mrf.mxu0
        %781 = vmatprep.mubr.f32.mxu0 0.0
        %782 = vmatmul.mubr.f32.gmra.mxu0 %v702
        %v783 = vpop.f32.mrf.mxu0
        %v784 = vadd.f32 %v687, %v783
        %v785 = vpop.f32.mrf.mxu0
        %786 = vmatprep.mubr.f32.mxu0 0.0
        %787 = vmatmul.mubr.f32.gmra.mxu0 %v705
        %v788 = vpop.f32.mrf.mxu0
        %v789 = vadd.f32 %v692, %v788
        %v790 = vpop.f32.mrf.mxu0
        %791 = vdwg.mxu0
        %v792 = vadd.f32 %v465, %v774
        %v793 = vadd.f32 %v466, %v779
        %v794 = vadd.f32 %v467, %v784
        %v795 = vadd.f32 %v468, %v789
        %796 = vst.msk [vmem:[#allocation2] sm:$0xff] %vm361, %v792
        %797 = vst.msk [vmem:[#allocation2 + $0x8] sm:$0xff] %vm361, %v793
        %798 = vst.msk [vmem:[#allocation2 + $0x10] sm:$0xff] %vm361, %v794
        %799 = vst.msk [vmem:[#allocation2 + $0x18] sm:$0xff] %vm361, %v795
        %v800 = vld [vmem:[#allocation2] sm:$0xff]
        %v801 = vld [vmem:[#allocation2 + $0x8] sm:$0xff]
        %v802 = vld [vmem:[#allocation2 + $0x10] sm:$0xff]
        %v803 = vld [vmem:[#allocation2 + $0x18] sm:$0xff]
        %804 = vrot.lane.b32.xlu0 %v800, 16
        %v805 = vpop.permute.xlu0 %804
        %v806 = vsel %vm469, %v805, %v800
        %807 = vrot.lane.b32.xlu0 %v801, 16
        %v808 = vpop.permute.xlu0 %807
        %v809 = vsel %vm469, %v808, %v801
        %810 = vrot.lane.b32.xlu0 %v802, 16
        %v811 = vpop.permute.xlu0 %810
        %v812 = vsel %vm469, %v811, %v802
        %813 = vrot.lane.b32.xlu0 %v803, 16
        %v814 = vpop.permute.xlu0 %813
        %v815 = vsel %vm469, %v814, %v803
        %816 = vrot.lane.b32.xlu0 %v806, 16
        %v817 = vpop.permute.xlu0 %816
        %818 = vrot.lane.b32.xlu0 %v809, 16
        %v819 = vpop.permute.xlu0 %818
        %820 = vrot.lane.b32.xlu0 %v812, 16
        %v821 = vpop.permute.xlu0 %820
        %822 = vrot.lane.b32.xlu0 %v815, 16
        %v823 = vpop.permute.xlu0 %822
        %v824 = vsel %vm469, %v817, %v800
        %v825 = vsel %vm469, %v819, %v801
        %v826 = vsel %vm469, %v821, %v802
        %v827 = vsel %vm469, %v823, %v803
        %vm828 = vcmp.ge.s32.totalorder %v464, 2
        %v829 = vsel %vm828, 1, 0
        %vm830 = vcmp.eq.s32.totalorder %v829, 1
        %835 = vrot.lane.b32.xlu0 %v824, 114
        %v836 = vpop.permute.xlu0 %835
        %837 = vrot.lane.b32.xlu0 %v825, 114
        %v838 = vpop.permute.xlu0 %837
        %839 = vrot.lane.b32.xlu0 %v826, 114
        %v840 = vpop.permute.xlu0 %839
        %841 = vrot.lane.b32.xlu0 %v827, 114
        %v842 = vpop.permute.xlu0 %841
        %v847 = vsel %vm830, %v836, 0.0
        %v848 = vsel %vm830, %v838, 0.0
        %v849 = vsel %vm830, %v840, 0.0
        %v850 = vsel %vm830, %v842, 0.0
        %vm851 = vcmp.lt.s32.totalorder %v464, 14
        %v852 = vsel %vm851, 1, 0
        %vm853 = vcmp.eq.s32.totalorder %v852, 1
        %854 = vrot.lane.b32.xlu0 %v824, 126
        %v855 = vpop.permute.xlu0 %854
        %856 = vrot.lane.b32.xlu0 %v825, 126
        %v857 = vpop.permute.xlu0 %856
        %858 = vrot.lane.b32.xlu0 %v826, 126
        %v859 = vpop.permute.xlu0 %858
        %860 = vrot.lane.b32.xlu0 %v827, 126
        %v861 = vpop.permute.xlu0 %860
        %v866 = vsel %vm853, %v855, 0.0
        %v867 = vsel %vm853, %v857, 0.0
        %v868 = vsel %vm853, %v859, 0.0
        %v869 = vsel %vm853, %v861, 0.0
        %s870 = scalar_lea.vmem %s3, 32
        %v871 = vld [vmem:[%s870] sm:$0xff]
        %v872 = vld [vmem:[%s870 + $0x8] sm:$0xff]
        %v873 = vld [vmem:[%s870 + $0x10] sm:$0xff]
        %v874 = vld [vmem:[%s870 + $0x18] sm:$0xff]
        %s875 = scalar_lea.vmem %s4, 32
        %v876 = vld [vmem:[%s875] sm:$0xff]
        %v877 = vld [vmem:[%s875 + $0x8] sm:$0xff]
        %v878 = vld [vmem:[%s875 + $0x10] sm:$0xff]
        %v879 = vld [vmem:[%s875 + $0x18] sm:$0xff]
        %881 = vset.pattern.permute.xlu0 0
        %882 = vperm.xlu0 %881, %v876
        %v883 = vpop.permute.xlu0 %882
        %886 = vset.pattern.permute.xlu0 0
        %887 = vperm.xlu0 %886, %v877
        %v888 = vpop.permute.xlu0 %887
        %891 = vset.pattern.permute.xlu0 0
        %892 = vperm.xlu0 %891, %v878
        %v893 = vpop.permute.xlu0 %892
        %896 = vset.pattern.permute.xlu0 0
        %897 = vperm.xlu0 %896, %v879
        %v898 = vpop.permute.xlu0 %897
        %v901 = vsel %vm564, %v871, 0
        %v904 = vsel %vm564, %v872, 0
        %v907 = vsel %vm564, %v873, 0
        %v910 = vsel %vm564, %v874, 0
        %912 = vmatprep.subr.mxu0 0.0
        %913 = vmatpush1.msra.mxu0 0.0
        %914 = vmatprep.subr.mxu0 0.0
        %915 = vmatpush1.msra.mxu0 0.0
        %916 = vmatprep.subr.mxu0 0.0
        %917 = vmatpush1.msra.mxu0 0.0
        %918 = vmatprep.subr.mxu0 0.0
        %919 = vmatpush1.msra.mxu0 0.0
        %920 = vmatprep.subr.mxu0 0.0
        %921 = vmatpush1.msra.mxu0 %v869
        %922 = vmatprep.subr.mxu0 0.0
        %923 = vmatpush1.msra.mxu0 %v868
        %924 = vmatprep.subr.mxu0 0.0
        %925 = vmatpush1.msra.mxu0 %v867
        %926 = vmatprep.subr.mxu0 0.0
        %927 = vmatpush1.msra.mxu0 %v866
        %928 = vmatprep.subr.mxu0 0.0
        %929 = vmatpush1.msra.mxu0 %v803
        %930 = vmatprep.subr.mxu0 0.0
        %931 = vmatpush1.msra.mxu0 %v802
        %932 = vmatprep.subr.mxu0 0.0
        %933 = vmatpush1.msra.mxu0 %v801
        %934 = vmatprep.subr.mxu0 0.0
        %935 = vmatpush1.msra.mxu0 %v800
        %936 = vmatprep.subr.mxu0 0.0
        %937 = vmatpush1.msra.mxu0 %v850
        %938 = vmatprep.subr.mxu0 0.0
        %939 = vmatpush1.msra.mxu0 %v849
        %940 = vmatprep.subr.mxu0 0.0
        %941 = vmatpush1.msra.mxu0 %v848
        %942 = vmatprep.subr.mxu0 0.0
        %943 = vmatpush1.msra.mxu0 %v847
        %944 = vmatprep.subr.mxu0 0.0
        %945 = vmatpush2.msra.mxu0 0.0
        %946 = vmatprep.subr.mxu0 0.0
        %947 = vmatpush2.msra.mxu0 0.0
        %948 = vmatprep.subr.mxu0 0.0
        %949 = vmatpush2.msra.mxu0 0.0
        %950 = vmatprep.subr.mxu0 0.0
        %951 = vmatpush2.msra.mxu0 0.0
        %952 = vmatprep.subr.mxu0 0.0
        %953 = vmatpush2.msra.mxu0 0.0
        %954 = vmatprep.subr.mxu0 0.0
        %955 = vmatpush2.msra.mxu0 0.0
        %956 = vmatprep.subr.mxu0 0.0
        %957 = vmatpush2.msra.mxu0 0.0
        %958 = vmatprep.subr.mxu0 0.0
        %959 = vmatpush2.msra.mxu0 0.0
        %960 = vmatprep.subr.mxu0 0.0
        %961 = vmatpush2.msra.mxu0 0.0
        %962 = vmatprep.subr.mxu0 0.0
        %963 = vmatpush2.msra.mxu0 0.0
        %964 = vmatprep.subr.mxu0 0.0
        %965 = vmatpush2.msra.mxu0 0.0
        %966 = vmatprep.subr.mxu0 0.0
        %967 = vmatpush2.msra.mxu0 0.0
        %968 = vmatprep.subr.mxu0 0.0
        %969 = vmatpush2.msra.mxu0 0.0
        %970 = vmatprep.subr.mxu0 0.0
        %971 = vmatpush2.msra.mxu0 0.0
        %972 = vmatprep.subr.mxu0 0.0
        %973 = vmatpush2.msra.mxu0 0.0
        %974 = vmatprep.subr.mxu0 0.0
        %975 = vmatpush2.msra.mxu0 0.0
        %976 = vmatprep.mubr.f32.mxu0 0.0
        %977 = vmatmul.mubr.f32.gmra.mxu0 %v901
        %v978 = vpop.f32.mrf.mxu0
        %v979 = vadd.f32 %v883, %v978
        %v980 = vpop.f32.mrf.mxu0
        %981 = vmatprep.mubr.f32.mxu0 0.0
        %982 = vmatmul.mubr.f32.gmra.mxu0 %v904
        %v983 = vpop.f32.mrf.mxu0
        %v984 = vadd.f32 %v888, %v983
        %v985 = vpop.f32.mrf.mxu0
        %986 = vmatprep.mubr.f32.mxu0 0.0
        %987 = vmatmul.mubr.f32.gmra.mxu0 %v907
        %v988 = vpop.f32.mrf.mxu0
        %v989 = vadd.f32 %v893, %v988
        %v990 = vpop.f32.mrf.mxu0
        %991 = vmatprep.mubr.f32.mxu0 0.0
        %992 = vmatmul.mubr.f32.gmra.mxu0 %v910
        %v993 = vpop.f32.mrf.mxu0
        %v994 = vadd.f32 %v898, %v993
        %v995 = vpop.f32.mrf.mxu0
        %996 = vdwg.mxu0
        %v997 = vmax.f32 %v979, 0.0
        %v998 = vmax.f32 %v984, 0.0
        %v999 = vmax.f32 %v989, 0.0
        %v1000 = vmax.f32 %v994, 0.0
        %s1001 = scalar_lea.vmem %s5, 32
        %v1002 = vld [vmem:[%s1001] sm:$0xff]
        %v1003 = vld [vmem:[%s1001 + $0x8] sm:$0xff]
        %v1004 = vld [vmem:[%s1001 + $0x10] sm:$0xff]
        %v1005 = vld [vmem:[%s1001 + $0x18] sm:$0xff]
        %s1006 = scalar_lea.vmem %s6, 32
        %v1007 = vld [vmem:[%s1006] sm:$0xff]
        %v1008 = vld [vmem:[%s1006 + $0x8] sm:$0xff]
        %v1009 = vld [vmem:[%s1006 + $0x10] sm:$0xff]
        %v1010 = vld [vmem:[%s1006 + $0x18] sm:$0xff]
        %1012 = vset.pattern.permute.xlu0 0
        %1013 = vperm.xlu0 %1012, %v1007
        %v1014 = vpop.permute.xlu0 %1013
        %1017 = vset.pattern.permute.xlu0 0
        %1018 = vperm.xlu0 %1017, %v1008
        %v1019 = vpop.permute.xlu0 %1018
        %1022 = vset.pattern.permute.xlu0 0
        %1023 = vperm.xlu0 %1022, %v1009
        %v1024 = vpop.permute.xlu0 %1023
        %1027 = vset.pattern.permute.xlu0 0
        %1028 = vperm.xlu0 %1027, %v1010
        %v1029 = vpop.permute.xlu0 %1028
        %v1032 = vsel %vm694, %v1002, 0
        %v1035 = vsel %vm694, %v1003, 0
        %v1038 = vsel %vm694, %v1004, 0
        %v1041 = vsel %vm694, %v1005, 0
        %1043 = vmatprep.subr.mxu0 0.0
        %1044 = vmatpush1.msra.mxu0 0.0
        %1045 = vmatprep.subr.mxu0 0.0
        %1046 = vmatpush1.msra.mxu0 0.0
        %1047 = vmatprep.subr.mxu0 0.0
        %1048 = vmatpush1.msra.mxu0 0.0
        %1049 = vmatprep.subr.mxu0 0.0
        %1050 = vmatpush1.msra.mxu0 0.0
        %1051 = vmatprep.subr.mxu0 0.0
        %1052 = vmatpush1.msra.mxu0 0.0
        %1053 = vmatprep.subr.mxu0 0.0
        %1054 = vmatpush1.msra.mxu0 0.0
        %1055 = vmatprep.subr.mxu0 0.0
        %1056 = vmatpush1.msra.mxu0 0.0
        %1057 = vmatprep.subr.mxu0 0.0
        %1058 = vmatpush1.msra.mxu0 0.0
        %1059 = vmatprep.subr.mxu0 0.0
        %1060 = vmatpush1.msra.mxu0 0.0
        %1061 = vmatprep.subr.mxu0 0.0
        %1062 = vmatpush1.msra.mxu0 0.0
        %1063 = vmatprep.subr.mxu0 0.0
        %1064 = vmatpush1.msra.mxu0 0.0
        %1065 = vmatprep.subr.mxu0 0.0
        %1066 = vmatpush1.msra.mxu0 0.0
        %1067 = vmatprep.subr.mxu0 0.0
        %1068 = vmatpush1.msra.mxu0 %v1000
        %1069 = vmatprep.subr.mxu0 0.0
        %1070 = vmatpush1.msra.mxu0 %v999
        %1071 = vmatprep.subr.mxu0 0.0
        %1072 = vmatpush1.msra.mxu0 %v998
        %1073 = vmatprep.subr.mxu0 0.0
        %1074 = vmatpush1.msra.mxu0 %v997
        %1075 = vmatprep.subr.mxu0 0.0
        %1076 = vmatpush2.msra.mxu0 0.0
        %1077 = vmatprep.subr.mxu0 0.0
        %1078 = vmatpush2.msra.mxu0 0.0
        %1079 = vmatprep.subr.mxu0 0.0
        %1080 = vmatpush2.msra.mxu0 0.0
        %1081 = vmatprep.subr.mxu0 0.0
        %1082 = vmatpush2.msra.mxu0 0.0
        %1083 = vmatprep.subr.mxu0 0.0
        %1084 = vmatpush2.msra.mxu0 0.0
        %1085 = vmatprep.subr.mxu0 0.0
        %1086 = vmatpush2.msra.mxu0 0.0
        %1087 = vmatprep.subr.mxu0 0.0
        %1088 = vmatpush2.msra.mxu0 0.0
        %1089 = vmatprep.subr.mxu0 0.0
        %1090 = vmatpush2.msra.mxu0 0.0
        %1091 = vmatprep.subr.mxu0 0.0
        %1092 = vmatpush2.msra.mxu0 0.0
        %1093 = vmatprep.subr.mxu0 0.0
        %1094 = vmatpush2.msra.mxu0 0.0
        %1095 = vmatprep.subr.mxu0 0.0
        %1096 = vmatpush2.msra.mxu0 0.0
        %1097 = vmatprep.subr.mxu0 0.0
        %1098 = vmatpush2.msra.mxu0 0.0
        %1099 = vmatprep.subr.mxu0 0.0
        %1100 = vmatpush2.msra.mxu0 0.0
        %1101 = vmatprep.subr.mxu0 0.0
        %1102 = vmatpush2.msra.mxu0 0.0
        %1103 = vmatprep.subr.mxu0 0.0
        %1104 = vmatpush2.msra.mxu0 0.0
        %1105 = vmatprep.subr.mxu0 0.0
        %1106 = vmatpush2.msra.mxu0 0.0
        %1107 = vmatprep.mubr.f32.mxu0 0.0
        %1108 = vmatmul.mubr.f32.gmra.mxu0 %v1032
        %v1109 = vpop.f32.mrf.mxu0
        %v1110 = vadd.f32 %v1014, %v1109
        %v1111 = vpop.f32.mrf.mxu0
        %1112 = vmatprep.mubr.f32.mxu0 0.0
        %1113 = vmatmul.mubr.f32.gmra.mxu0 %v1035
        %v1114 = vpop.f32.mrf.mxu0
        %v1115 = vadd.f32 %v1019, %v1114
        %v1116 = vpop.f32.mrf.mxu0
        %1117 = vmatprep.mubr.f32.mxu0 0.0
        %1118 = vmatmul.mubr.f32.gmra.mxu0 %v1038
        %v1119 = vpop.f32.mrf.mxu0
        %v1120 = vadd.f32 %v1024, %v1119
        %v1121 = vpop.f32.mrf.mxu0
        %1122 = vmatprep.mubr.f32.mxu0 0.0
        %1123 = vmatmul.mubr.f32.gmra.mxu0 %v1041
        %v1124 = vpop.f32.mrf.mxu0
        %v1125 = vadd.f32 %v1029, %v1124
        %v1126 = vpop.f32.mrf.mxu0
        %1127 = vdwg.mxu0
        %v1128 = vadd.f32 %v800, %v1110
        %v1129 = vadd.f32 %v801, %v1115
        %v1130 = vadd.f32 %v802, %v1120
        %v1131 = vadd.f32 %v803, %v1125
        %1132 = vst.msk [vmem:[#allocation2] sm:$0xff] %vm361, %v1128
        %1133 = vst.msk [vmem:[#allocation2 + $0x8] sm:$0xff] %vm361, %v1129
        %1134 = vst.msk [vmem:[#allocation2 + $0x10] sm:$0xff] %vm361, %v1130
        %1135 = vst.msk [vmem:[#allocation2 + $0x18] sm:$0xff] %vm361, %v1131
        %v1136 = vld [vmem:[#allocation2] sm:$0xff]
        %v1137 = vld [vmem:[#allocation2 + $0x8] sm:$0xff]
        %v1138 = vld [vmem:[#allocation2 + $0x10] sm:$0xff]
        %v1139 = vld [vmem:[#allocation2 + $0x18] sm:$0xff]
        %1140 = vrot.lane.b32.xlu0 %v1136, 16
        %v1141 = vpop.permute.xlu0 %1140
        %v1142 = vsel %vm469, %v1141, %v1136
        %1143 = vrot.lane.b32.xlu0 %v1137, 16
        %v1144 = vpop.permute.xlu0 %1143
        %v1145 = vsel %vm469, %v1144, %v1137
        %1146 = vrot.lane.b32.xlu0 %v1138, 16
        %v1147 = vpop.permute.xlu0 %1146
        %v1148 = vsel %vm469, %v1147, %v1138
        %1149 = vrot.lane.b32.xlu0 %v1139, 16
        %v1150 = vpop.permute.xlu0 %1149
        %v1151 = vsel %vm469, %v1150, %v1139
        %1152 = vrot.lane.b32.xlu0 %v1142, 16
        %v1153 = vpop.permute.xlu0 %1152
        %1154 = vrot.lane.b32.xlu0 %v1145, 16
        %v1155 = vpop.permute.xlu0 %1154
        %1156 = vrot.lane.b32.xlu0 %v1148, 16
        %v1157 = vpop.permute.xlu0 %1156
        %1158 = vrot.lane.b32.xlu0 %v1151, 16
        %v1159 = vpop.permute.xlu0 %1158
        %v1160 = vsel %vm469, %v1153, %v1136
        %v1161 = vsel %vm469, %v1155, %v1137
        %v1162 = vsel %vm469, %v1157, %v1138
        %v1163 = vsel %vm469, %v1159, %v1139
        %vm1164 = vcmp.ge.s32.totalorder %v464, 4
        %v1165 = vsel %vm1164, 1, 0
        %vm1166 = vcmp.eq.s32.totalorder %v1165, 1
        %1171 = vrot.lane.b32.xlu0 %v1160, 116
        %v1172 = vpop.permute.xlu0 %1171
        %1173 = vrot.lane.b32.xlu0 %v1161, 116
        %v1174 = vpop.permute.xlu0 %1173
        %1175 = vrot.lane.b32.xlu0 %v1162, 116
        %v1176 = vpop.permute.xlu0 %1175
        %1177 = vrot.lane.b32.xlu0 %v1163, 116
        %v1178 = vpop.permute.xlu0 %1177
        %v1183 = vsel %vm1166, %v1172, 0.0
        %v1184 = vsel %vm1166, %v1174, 0.0
        %v1185 = vsel %vm1166, %v1176, 0.0
        %v1186 = vsel %vm1166, %v1178, 0.0
        %vm1187 = vcmp.lt.s32.totalorder %v464, 12
        %v1188 = vsel %vm1187, 1, 0
        %vm1189 = vcmp.eq.s32.totalorder %v1188, 1
        %1190 = vrot.lane.b32.xlu0 %v1160, 124
        %v1191 = vpop.permute.xlu0 %1190
        %1192 = vrot.lane.b32.xlu0 %v1161, 124
        %v1193 = vpop.permute.xlu0 %1192
        %1194 = vrot.lane.b32.xlu0 %v1162, 124
        %v1195 = vpop.permute.xlu0 %1194
        %1196 = vrot.lane.b32.xlu0 %v1163, 124
        %v1197 = vpop.permute.xlu0 %1196
        %v1202 = vsel %vm1189, %v1191, 0.0
        %v1203 = vsel %vm1189, %v1193, 0.0
        %v1204 = vsel %vm1189, %v1195, 0.0
        %v1205 = vsel %vm1189, %v1197, 0.0
        %s1206 = scalar_lea.vmem %s3, 64
        %v1207 = vld [vmem:[%s1206] sm:$0xff]
        %v1208 = vld [vmem:[%s1206 + $0x8] sm:$0xff]
        %v1209 = vld [vmem:[%s1206 + $0x10] sm:$0xff]
        %v1210 = vld [vmem:[%s1206 + $0x18] sm:$0xff]
        %s1211 = scalar_lea.vmem %s4, 64
        %v1212 = vld [vmem:[%s1211] sm:$0xff]
        %v1213 = vld [vmem:[%s1211 + $0x8] sm:$0xff]
        %v1214 = vld [vmem:[%s1211 + $0x10] sm:$0xff]
        %v1215 = vld [vmem:[%s1211 + $0x18] sm:$0xff]
        %1217 = vset.pattern.permute.xlu0 0
        %1218 = vperm.xlu0 %1217, %v1212
        %v1219 = vpop.permute.xlu0 %1218
        %1222 = vset.pattern.permute.xlu0 0
        %1223 = vperm.xlu0 %1222, %v1213
        %v1224 = vpop.permute.xlu0 %1223
        %1227 = vset.pattern.permute.xlu0 0
        %1228 = vperm.xlu0 %1227, %v1214
        %v1229 = vpop.permute.xlu0 %1228
        %1232 = vset.pattern.permute.xlu0 0
        %1233 = vperm.xlu0 %1232, %v1215
        %v1234 = vpop.permute.xlu0 %1233
        %v1237 = vsel %vm564, %v1207, 0
        %v1240 = vsel %vm564, %v1208, 0
        %v1243 = vsel %vm564, %v1209, 0
        %v1246 = vsel %vm564, %v1210, 0
        %1248 = vmatprep.subr.mxu0 0.0
        %1249 = vmatpush1.msra.mxu0 0.0
        %1250 = vmatprep.subr.mxu0 0.0
        %1251 = vmatpush1.msra.mxu0 0.0
        %1252 = vmatprep.subr.mxu0 0.0
        %1253 = vmatpush1.msra.mxu0 0.0
        %1254 = vmatprep.subr.mxu0 0.0
        %1255 = vmatpush1.msra.mxu0 0.0
        %1256 = vmatprep.subr.mxu0 0.0
        %1257 = vmatpush1.msra.mxu0 %v1205
        %1258 = vmatprep.subr.mxu0 0.0
        %1259 = vmatpush1.msra.mxu0 %v1204
        %1260 = vmatprep.subr.mxu0 0.0
        %1261 = vmatpush1.msra.mxu0 %v1203
        %1262 = vmatprep.subr.mxu0 0.0
        %1263 = vmatpush1.msra.mxu0 %v1202
        %1264 = vmatprep.subr.mxu0 0.0
        %1265 = vmatpush1.msra.mxu0 %v1139
        %1266 = vmatprep.subr.mxu0 0.0
        %1267 = vmatpush1.msra.mxu0 %v1138
        %1268 = vmatprep.subr.mxu0 0.0
        %1269 = vmatpush1.msra.mxu0 %v1137
        %1270 = vmatprep.subr.mxu0 0.0
        %1271 = vmatpush1.msra.mxu0 %v1136
        %1272 = vmatprep.subr.mxu0 0.0
        %1273 = vmatpush1.msra.mxu0 %v1186
        %1274 = vmatprep.subr.mxu0 0.0
        %1275 = vmatpush1.msra.mxu0 %v1185
        %1276 = vmatprep.subr.mxu0 0.0
        %1277 = vmatpush1.msra.mxu0 %v1184
        %1278 = vmatprep.subr.mxu0 0.0
        %1279 = vmatpush1.msra.mxu0 %v1183
        %1280 = vmatprep.subr.mxu0 0.0
        %1281 = vmatpush2.msra.mxu0 0.0
        %1282 = vmatprep.subr.mxu0 0.0
        %1283 = vmatpush2.msra.mxu0 0.0
        %1284 = vmatprep.subr.mxu0 0.0
        %1285 = vmatpush2.msra.mxu0 0.0
        %1286 = vmatprep.subr.mxu0 0.0
        %1287 = vmatpush2.msra.mxu0 0.0
        %1288 = vmatprep.subr.mxu0 0.0
        %1289 = vmatpush2.msra.mxu0 0.0
        %1290 = vmatprep.subr.mxu0 0.0
        %1291 = vmatpush2.msra.mxu0 0.0
        %1292 = vmatprep.subr.mxu0 0.0
        %1293 = vmatpush2.msra.mxu0 0.0
        %1294 = vmatprep.subr.mxu0 0.0
        %1295 = vmatpush2.msra.mxu0 0.0
        %1296 = vmatprep.subr.mxu0 0.0
        %1297 = vmatpush2.msra.mxu0 0.0
        %1298 = vmatprep.subr.mxu0 0.0
        %1299 = vmatpush2.msra.mxu0 0.0
        %1300 = vmatprep.subr.mxu0 0.0
        %1301 = vmatpush2.msra.mxu0 0.0
        %1302 = vmatprep.subr.mxu0 0.0
        %1303 = vmatpush2.msra.mxu0 0.0
        %1304 = vmatprep.subr.mxu0 0.0
        %1305 = vmatpush2.msra.mxu0 0.0
        %1306 = vmatprep.subr.mxu0 0.0
        %1307 = vmatpush2.msra.mxu0 0.0
        %1308 = vmatprep.subr.mxu0 0.0
        %1309 = vmatpush2.msra.mxu0 0.0
        %1310 = vmatprep.subr.mxu0 0.0
        %1311 = vmatpush2.msra.mxu0 0.0
        %1312 = vmatprep.mubr.f32.mxu0 0.0
        %1313 = vmatmul.mubr.f32.gmra.mxu0 %v1237
        %v1314 = vpop.f32.mrf.mxu0
        %v1315 = vadd.f32 %v1219, %v1314
        %v1316 = vpop.f32.mrf.mxu0
        %1317 = vmatprep.mubr.f32.mxu0 0.0
        %1318 = vmatmul.mubr.f32.gmra.mxu0 %v1240
        %v1319 = vpop.f32.mrf.mxu0
        %v1320 = vadd.f32 %v1224, %v1319
        %v1321 = vpop.f32.mrf.mxu0
        %1322 = vmatprep.mubr.f32.mxu0 0.0
        %1323 = vmatmul.mubr.f32.gmra.mxu0 %v1243
        %v1324 = vpop.f32.mrf.mxu0
        %v1325 = vadd.f32 %v1229, %v1324
        %v1326 = vpop.f32.mrf.mxu0
        %1327 = vmatprep.mubr.f32.mxu0 0.0
        %1328 = vmatmul.mubr.f32.gmra.mxu0 %v1246
        %v1329 = vpop.f32.mrf.mxu0
        %v1330 = vadd.f32 %v1234, %v1329
        %v1331 = vpop.f32.mrf.mxu0
        %1332 = vdwg.mxu0
        %v1333 = vmax.f32 %v1315, 0.0
        %v1334 = vmax.f32 %v1320, 0.0
        %v1335 = vmax.f32 %v1325, 0.0
        %v1336 = vmax.f32 %v1330, 0.0
        %s1337 = scalar_lea.vmem %s5, 64
        %v1338 = vld [vmem:[%s1337] sm:$0xff]
        %v1339 = vld [vmem:[%s1337 + $0x8] sm:$0xff]
        %v1340 = vld [vmem:[%s1337 + $0x10] sm:$0xff]
        %v1341 = vld [vmem:[%s1337 + $0x18] sm:$0xff]
        %s1342 = scalar_lea.vmem %s6, 64
        %v1343 = vld [vmem:[%s1342] sm:$0xff]
        %v1344 = vld [vmem:[%s1342 + $0x8] sm:$0xff]
        %v1345 = vld [vmem:[%s1342 + $0x10] sm:$0xff]
        %v1346 = vld [vmem:[%s1342 + $0x18] sm:$0xff]
        %1348 = vset.pattern.permute.xlu0 0
        %1349 = vperm.xlu0 %1348, %v1343
        %v1350 = vpop.permute.xlu0 %1349
        %1353 = vset.pattern.permute.xlu0 0
        %1354 = vperm.xlu0 %1353, %v1344
        %v1355 = vpop.permute.xlu0 %1354
        %1358 = vset.pattern.permute.xlu0 0
        %1359 = vperm.xlu0 %1358, %v1345
        %v1360 = vpop.permute.xlu0 %1359
        %1363 = vset.pattern.permute.xlu0 0
        %1364 = vperm.xlu0 %1363, %v1346
        %v1365 = vpop.permute.xlu0 %1364
        %v1368 = vsel %vm694, %v1338, 0
        %v1371 = vsel %vm694, %v1339, 0
        %v1374 = vsel %vm694, %v1340, 0
        %v1377 = vsel %vm694, %v1341, 0
        %1379 = vmatprep.subr.mxu0 0.0
        %1380 = vmatpush1.msra.mxu0 0.0
        %1381 = vmatprep.subr.mxu0 0.0
        %1382 = vmatpush1.msra.mxu0 0.0
        %1383 = vmatprep.subr.mxu0 0.0
        %1384 = vmatpush1.msra.mxu0 0.0
        %1385 = vmatprep.subr.mxu0 0.0
        %1386 = vmatpush1.msra.mxu0 0.0
        %1387 = vmatprep.subr.mxu0 0.0
        %1388 = vmatpush1.msra.mxu0 0.0
        %1389 = vmatprep.subr.mxu0 0.0
        %1390 = vmatpush1.msra.mxu0 0.0
        %1391 = vmatprep.subr.mxu0 0.0
        %1392 = vmatpush1.msra.mxu0 0.0
        %1393 = vmatprep.subr.mxu0 0.0
        %1394 = vmatpush1.msra.mxu0 0.0
        %1395 = vmatprep.subr.mxu0 0.0
        %1396 = vmatpush1.msra.mxu0 0.0
        %1397 = vmatprep.subr.mxu0 0.0
        %1398 = vmatpush1.msra.mxu0 0.0
        %1399 = vmatprep.subr.mxu0 0.0
        %1400 = vmatpush1.msra.mxu0 0.0
        %1401 = vmatprep.subr.mxu0 0.0
        %1402 = vmatpush1.msra.mxu0 0.0
        %1403 = vmatprep.subr.mxu0 0.0
        %1404 = vmatpush1.msra.mxu0 %v1336
        %1405 = vmatprep.subr.mxu0 0.0
        %1406 = vmatpush1.msra.mxu0 %v1335
        %1407 = vmatprep.subr.mxu0 0.0
        %1408 = vmatpush1.msra.mxu0 %v1334
        %1409 = vmatprep.subr.mxu0 0.0
        %1410 = vmatpush1.msra.mxu0 %v1333
        %1411 = vmatprep.subr.mxu0 0.0
        %1412 = vmatpush2.msra.mxu0 0.0
        %1413 = vmatprep.subr.mxu0 0.0
        %1414 = vmatpush2.msra.mxu0 0.0
        %1415 = vmatprep.subr.mxu0 0.0
        %1416 = vmatpush2.msra.mxu0 0.0
        %1417 = vmatprep.subr.mxu0 0.0
        %1418 = vmatpush2.msra.mxu0 0.0
        %1419 = vmatprep.subr.mxu0 0.0
        %1420 = vmatpush2.msra.mxu0 0.0
        %1421 = vmatprep.subr.mxu0 0.0
        %1422 = vmatpush2.msra.mxu0 0.0
        %1423 = vmatprep.subr.mxu0 0.0
        %1424 = vmatpush2.msra.mxu0 0.0
        %1425 = vmatprep.subr.mxu0 0.0
        %1426 = vmatpush2.msra.mxu0 0.0
        %1427 = vmatprep.subr.mxu0 0.0
        %1428 = vmatpush2.msra.mxu0 0.0
        %1429 = vmatprep.subr.mxu0 0.0
        %1430 = vmatpush2.msra.mxu0 0.0
        %1431 = vmatprep.subr.mxu0 0.0
        %1432 = vmatpush2.msra.mxu0 0.0
        %1433 = vmatprep.subr.mxu0 0.0
        %1434 = vmatpush2.msra.mxu0 0.0
        %1435 = vmatprep.subr.mxu0 0.0
        %1436 = vmatpush2.msra.mxu0 0.0
        %1437 = vmatprep.subr.mxu0 0.0
        %1438 = vmatpush2.msra.mxu0 0.0
        %1439 = vmatprep.subr.mxu0 0.0
        %1440 = vmatpush2.msra.mxu0 0.0
        %1441 = vmatprep.subr.mxu0 0.0
        %1442 = vmatpush2.msra.mxu0 0.0
        %1443 = vmatprep.mubr.f32.mxu0 0.0
        %1444 = vmatmul.mubr.f32.gmra.mxu0 %v1368
        %v1445 = vpop.f32.mrf.mxu0
        %v1446 = vadd.f32 %v1350, %v1445
        %v1447 = vpop.f32.mrf.mxu0
        %1448 = vmatprep.mubr.f32.mxu0 0.0
        %1449 = vmatmul.mubr.f32.gmra.mxu0 %v1371
        %v1450 = vpop.f32.mrf.mxu0
        %v1451 = vadd.f32 %v1355, %v1450
        %v1452 = vpop.f32.mrf.mxu0
        %1453 = vmatprep.mubr.f32.mxu0 0.0
        %1454 = vmatmul.mubr.f32.gmra.mxu0 %v1374
        %v1455 = vpop.f32.mrf.mxu0
        %v1456 = vadd.f32 %v1360, %v1455
        %v1457 = vpop.f32.mrf.mxu0
        %1458 = vmatprep.mubr.f32.mxu0 0.0
        %1459 = vmatmul.mubr.f32.gmra.mxu0 %v1377
        %v1460 = vpop.f32.mrf.mxu0
        %v1461 = vadd.f32 %v1365, %v1460
        %v1462 = vpop.f32.mrf.mxu0
        %1463 = vdwg.mxu0
        %v1464 = vadd.f32 %v1136, %v1446
        %v1465 = vadd.f32 %v1137, %v1451
        %v1466 = vadd.f32 %v1138, %v1456
        %v1467 = vadd.f32 %v1139, %v1461
        %1468 = vst.msk [vmem:[#allocation2] sm:$0xff] %vm361, %v1464
        %1469 = vst.msk [vmem:[#allocation2 + $0x8] sm:$0xff] %vm361, %v1465
        %1470 = vst.msk [vmem:[#allocation2 + $0x10] sm:$0xff] %vm361, %v1466
        %1471 = vst.msk [vmem:[#allocation2 + $0x18] sm:$0xff] %vm361, %v1467
        %v1472 = vld [vmem:[%s7] sm:$0xff]
        %v1473 = vld [vmem:[#allocation2] sm:$0xff]
        %v1474 = vld [vmem:[#allocation2 + $0x8] sm:$0xff]
        %v1475 = vld [vmem:[#allocation2 + $0x10] sm:$0xff]
        %v1476 = vld [vmem:[#allocation2 + $0x18] sm:$0xff]
        %v1477 = vld [vmem:[%s8] sm:$0xff]
        %1479 = vset.pattern.permute.xlu0 0
        %1480 = vperm.xlu0 %1479, %v1477
        %v1481 = vpop.permute.xlu0 %1480
        %v1484 = vsel %vm694, %v1472, 0
        %1486 = vmatprep.subr.mxu0 0.0
        %1487 = vmatpush1.msra.mxu0 0.0
        %1488 = vmatprep.subr.mxu0 0.0
        %1489 = vmatpush1.msra.mxu0 0.0
        %1490 = vmatprep.subr.mxu0 0.0
        %1491 = vmatpush1.msra.mxu0 0.0
        %1492 = vmatprep.subr.mxu0 0.0
        %1493 = vmatpush1.msra.mxu0 0.0
        %1494 = vmatprep.subr.mxu0 0.0
        %1495 = vmatpush1.msra.mxu0 0.0
        %1496 = vmatprep.subr.mxu0 0.0
        %1497 = vmatpush1.msra.mxu0 0.0
        %1498 = vmatprep.subr.mxu0 0.0
        %1499 = vmatpush1.msra.mxu0 0.0
        %1500 = vmatprep.subr.mxu0 0.0
        %1501 = vmatpush1.msra.mxu0 0.0
        %1502 = vmatprep.subr.mxu0 0.0
        %1503 = vmatpush1.msra.mxu0 0.0
        %1504 = vmatprep.subr.mxu0 0.0
        %1505 = vmatpush1.msra.mxu0 0.0
        %1506 = vmatprep.subr.mxu0 0.0
        %1507 = vmatpush1.msra.mxu0 0.0
        %1508 = vmatprep.subr.mxu0 0.0
        %1509 = vmatpush1.msra.mxu0 0.0
        %1510 = vmatprep.subr.mxu0 0.0
        %1511 = vmatpush1.msra.mxu0 %v1476
        %1512 = vmatprep.subr.mxu0 0.0
        %1513 = vmatpush1.msra.mxu0 %v1475
        %1514 = vmatprep.subr.mxu0 0.0
        %1515 = vmatpush1.msra.mxu0 %v1474
        %1516 = vmatprep.subr.mxu0 0.0
        %1517 = vmatpush1.msra.mxu0 %v1473
        %1518 = vmatprep.subr.mxu0 0.0
        %1519 = vmatpush2.msra.mxu0 0.0
        %1520 = vmatprep.subr.mxu0 0.0
        %1521 = vmatpush2.msra.mxu0 0.0
        %1522 = vmatprep.subr.mxu0 0.0
        %1523 = vmatpush2.msra.mxu0 0.0
        %1524 = vmatprep.subr.mxu0 0.0
        %1525 = vmatpush2.msra.mxu0 0.0
        %1526 = vmatprep.subr.mxu0 0.0
        %1527 = vmatpush2.msra.mxu0 0.0
        %1528 = vmatprep.subr.mxu0 0.0
        %1529 = vmatpush2.msra.mxu0 0.0
        %1530 = vmatprep.subr.mxu0 0.0
        %1531 = vmatpush2.msra.mxu0 0.0
        %1532 = vmatprep.subr.mxu0 0.0
        %1533 = vmatpush2.msra.mxu0 0.0
        %1534 = vmatprep.subr.mxu0 0.0
        %1535 = vmatpush2.msra.mxu0 0.0
        %1536 = vmatprep.subr.mxu0 0.0
        %1537 = vmatpush2.msra.mxu0 0.0
        %1538 = vmatprep.subr.mxu0 0.0
        %1539 = vmatpush2.msra.mxu0 0.0
        %1540 = vmatprep.subr.mxu0 0.0
        %1541 = vmatpush2.msra.mxu0 0.0
        %1542 = vmatprep.subr.mxu0 0.0
        %1543 = vmatpush2.msra.mxu0 0.0
        %1544 = vmatprep.subr.mxu0 0.0
        %1545 = vmatpush2.msra.mxu0 0.0
        %1546 = vmatprep.subr.mxu0 0.0
        %1547 = vmatpush2.msra.mxu0 0.0
        %1548 = vmatprep.subr.mxu0 0.0
        %1549 = vmatpush2.msra.mxu0 0.0
        %1550 = vmatprep.mubr.f32.mxu0 0.0
        %1551 = vmatmul.mubr.f32.gmra.mxu0 %v1484
        %v1552 = vpop.f32.mrf.mxu0
        %v1553 = vadd.f32 %v1481, %v1552
        %v1554 = vpop.f32.mrf.mxu0
        %1555 = vdwg.mxu0
        %1556 = vst.msk [vmem:[%s325] sm:$0xff] %vm361, %v1553
        %s1557 = sand.u32 %s225, 1
        %s1558 = scalar_lea.sflag [#allocation4], %s1557
        %s1559 = sand.u32 %s225, 1
        %s1560 = smul.addr %s1559, 8
        %s1561 = scalar_lea.vmem [#allocation3], %s1560
        // Predicated region
        $region57: #{tpu_custom_call.1} parent=55 // pred_check
          %p1562 = pneg %p235
        $region58: #{tpu_custom_call.1} parent=55 // pred_check_branch
          %1564 = sbr.rel (%p1562) target = $region60
        $region59: #{tpu_custom_call.1} parent=55 // pred_region
          %s1566 = ssub.s32 128, 128
          %1567 = vsyncadd %s1558, %s1566
          %s1568 = smul.addr %s23, 128
          %s1569 = scalar_lea.hbm %s9, %s1568
          %s1571 = sshll.u32 %s1561, 4
          %s1572 = int_to_ptr.vmem [resolvable:$true] %s1571
          %1574 = dma.vmem_to_hbm [thread:$0]  %s1572, 128, %s1569, %s1558
        $region60: #{tpu_custom_call.1} parent=55 // pred_fallthru
          _
      $region56: #{tpu_custom_call.1} parent=5 // pred_fallthru
        _
      %p1575 = scmp.le.s32.totalorder 2, %s18
      // Predicated region
      $region61: #{tpu_custom_call.1} parent=5 // pred_check
        %p1576 = pneg %p1575
      $region62: #{tpu_custom_call.1} parent=5 // pred_check_branch
        %1578 = sbr.rel (%p1576) target = $region64
      $region63: #{tpu_custom_call.1} parent=5 // pred_region
        %s1579 = ssub.s32 %s18, 2
        // Predicated region
        $region65: #{tpu_custom_call.1} parent=63 // pred_check
          %p1580 = pneg %p241
        $region66: #{tpu_custom_call.1} parent=63 // pred_check_branch
          %1582 = sbr.rel (%p1580) target = $region68
        $region67: #{tpu_custom_call.1} parent=63 // pred_region
          %s1583 = sand.u32 %s226, 1
          %s1584 = scalar_lea.sflag [#allocation4], %s1583
          %s1585 = sand.u32 %s226, 1
          %s1586 = smul.addr %s1585, 8
          %s1587 = scalar_lea.vmem [#allocation3], %s1586
          %1588 = dma.done %s1584, 128
        $region68: #{tpu_custom_call.1} parent=63 // pred_fallthru
          _
      $region64: #{tpu_custom_call.1} parent=5 // pred_fallthru
        _
    $region6: #{tpu_custom_call.1} parent=1 // loop_footer
      %s22 = sadd.s32 1, %s18
    $region7: #{tpu_custom_call.1} parent=1 // loop_footer_branch
      %17 = sbr.rel target = $region3
    $region8: #{tpu_custom_call.1} parent=1 // loop_exit
      _
    %1589 = vsyncpa [#allocation4], 1
    %s1590 = scalar_lea.sflag [#allocation4], 1
    %1591 = vsyncpa %s1590, 1

</llo_original>
